<compile_context>
chip_gen: v7x
topology: tpu7x:2x2x1
jax: 0.10.0
libtpu: 0.0.40
codegen_flags: <defaults>
</compile_context>

<pallas_src>
import functools
import numpy as np
import jax
import jax.numpy as jnp
from jax.experimental import pallas as pl
from jax.experimental.pallas import tpu as pltpu


# ----------------------------- shared helpers -----------------------------

def _elu(x):
    # exp(min(x, 0)) keeps the inactive branch finite (safe if this path is differentiated).
    return jnp.where(x > 0.0, x, jnp.exp(jnp.minimum(x, 0.0)) - 1.0)


# ----------------------------- Pallas kernel -----------------------------

def _make_score_kernel(BM, N, Tm, H2):
    def score_kernel(attr_ref, hscore_ref, wti_ref, dsq_ref, maskf_ref,
                     w1_ref, b1_ref, w2_ref, b2_ref,
                     w3_ref, b3_ref, w4_ref, b4_ref, out_ref):
        f32 = jnp.float32
        bf16 = jnp.bfloat16

        # ---- interaction feature encoder: Linear(10->64) (lane-padded to 128) -> ReLU -> Linear(64->256)
        # attr/w1/w2/w3 arrive as bf16 (MXU-native); accumulate in f32.
        h = jnp.dot(attr_ref[...], w1_ref[...], preferred_element_type=f32) + b1_ref[...]
        h = jnp.maximum(h, 0.0)
        h = jnp.dot(h.astype(bf16), w2_ref[...], preferred_element_type=f32) + b2_ref[...]

        # leading-dim-only split; minor dims (Tm, H2) stay (8,128)-tile aligned (Tm % 8 == 0).
        feat = h.reshape(BM, N, Tm, H2)
        feat = jnp.max(feat, axis=1)                     # max over agents -> (BM, Tm, H2)
        feat = jnp.sum(feat, axis=1)                     # sum over time (1/Tm folded into w3) -> (BM, H2)

        # ---- interaction feature decoder: Linear(256->64) -> ELU -> Linear(64->4) -> Sigmoid
        g = jnp.dot(feat.astype(bf16), w3_ref[...], preferred_element_type=f32) + b3_ref[...]
        g = _elu(g)
        g = jnp.dot(g, w4_ref[...], preferred_element_type=f32) + b4_ref[...]
        inter = 1.0 / (1.0 + jnp.exp(-g))                                   # (BM, 4)

        # latent half of the score dot product (hard half precomputed in glue)
        inter_score = jnp.sum(inter * wti_ref[...], axis=1, keepdims=True)  # (BM, 1)

        # ---- collision cost, lane-dense (BM, N*Tm); 10x scale folded into maskf
        coll = jnp.sum(jnp.exp(-0.2 * dsq_ref[...]) * maskf_ref[...],
                       axis=1, keepdims=True)                               # (BM, 1)

        out_ref[...] = hscore_ref[...] - inter_score - coll                 # (BM, 1)
    return score_kernel


# ----------------------------- wrapper (glue + single pallas_call) -----------------------------

@functools.partial(jax.jit, static_argnames=("timesteps",))
def score_decoder_forward(params, ego_traj, ego_encoding, agents_traj, agents_states, timesteps):
    f32 = jnp.float32
    bf16 = jnp.bfloat16
    B, M, T, _ = ego_traj.shape
    N = agents_traj.shape[2]
    Tm = int(timesteps)
    H2 = params['w2'].shape[1]
    BM = B * M
    # Tm multiple of 8 keeps the in-kernel reshape copy-free (no VMEM relayout).
    assert Tm % 8 == 0, "timesteps must be a multiple of 8"

    # ---- weights decoder: input is all-ones (variable_cost=False) -> tiny MLP, plain JAX
    enc = jnp.ones_like(ego_encoding)
    hw = _elu(enc @ params['w5'] + params['b5'])
    weights = jax.nn.softplus(hw @ params['w6'] + params['b6'])             # (B, 8)

    ego = ego_traj[:, :, :Tm]                                               # (B, M, Tm, 6)
    agt = agents_traj[:, :, :, :Tm]                                         # (B, M, N, Tm, 3)
    agent_mask = (jnp.sum(agents_states, -1) != 0).astype(f32)              # (B, N)

    # ---- hard-coded ego features (elementwise, glue) -> (B, M, 4)
    speed = ego[..., 3]
    accel = ego[..., 4]
    curv = ego[..., 5]
    jerk = jnp.diff(accel, axis=-1) / 0.1
    jerk = jnp.concatenate([jerk[:, :, :1], jerk], axis=-1)
    lat = speed ** 2 * curv
    hard = jnp.stack([
        -jnp.clip(jnp.mean(speed, -1), 0.0, 15.0) / 15.0,
        jnp.clip(jnp.mean(jnp.abs(accel), -1), 0.0, 4.0) / 4.0,
        jnp.clip(jnp.mean(jnp.abs(jerk), -1), 0.0, 6.0) / 6.0,
        jnp.clip(jnp.mean(jnp.abs(lat), -1), 0.0, 5.0) / 5.0], axis=-1)     # (B, M, 4)

    # ---- interaction attributes (elementwise prep, glue); arctan2 kept out of the kernel
    rel_yaw = agt[..., 2] - ego[:, :, None, :, 2]
    rel_yaw = jnp.arctan2(jnp.sin(rel_yaw), jnp.cos(rel_yaw))               # (B, M, N, Tm)
    rp_x = (agt[..., 0] - ego[:, :, None, :, 0]) * jnp.cos(rel_yaw)
    rp_y = (agt[..., 1] - ego[:, :, None, :, 1]) * jnp.sin(rel_yaw)
    a_vel = jnp.diff(agt[..., :2], axis=-2) / 0.1
    a_vel = jnp.concatenate([a_vel[:, :, :, :1, :], a_vel], axis=-2)        # (B, M, N, Tm, 2)
    ego_vx = ego[..., 3] * jnp.cos(ego[..., 2])
    ego_vy = ego[..., 3] * jnp.sin(ego[..., 2])
    rv_x = (a_vel[..., 0] - ego_vx[:, :, None, :]) * jnp.cos(rel_yaw)
    rv_y = (a_vel[..., 1] - ego_vy[:, :, None, :]) * jnp.sin(rel_yaw)
    rel_attr = jnp.stack([rp_x, rp_y, rel_yaw, rv_x, rv_y], axis=-1)        # (B, M, N, Tm, 5)
    agt_attr = jnp.broadcast_to(agents_states[:, None, :, None, 6:],
                                (B, M, N, Tm, agents_states.shape[-1] - 6))
    attributes = jnp.concatenate([rel_attr, agt_attr], axis=-1)             # (B, M, N, Tm, 10)
    attributes = attributes * agent_mask[:, None, :, None, None]
    attr_rows = attributes.reshape(BM * N * Tm, 10)
    # lane-pad 10 -> 128 (contiguous DMA tiles) and cast to bf16 for the MXU
    attr_pad = jnp.pad(attr_rows, ((0, 0), (0, 128 - 10))).astype(bf16)     # (BM*N*Tm, 128)

    # ---- collision distances, lane-dense (BM, N*Tm); fold the 10x scale into the mask
    dx = agt[..., 0] - ego[:, :, None, :, 0]
    dy = agt[..., 1] - ego[:, :, None, :, 1]
    dsq = (dx * dx + dy * dy).reshape(BM, N * Tm)
    maskf10 = (10.0 * jnp.broadcast_to(agent_mask[:, None, :, None],
                                       (B, M, N, Tm))).reshape(BM, N * Tm)

    # ---- score pieces: hard-feature half precomputed; latent weights split off
    weights_rep = jnp.repeat(weights, M, axis=0)                            # (BM, 8): row b*M+m = weights[b]
    hard_score = -jnp.sum(hard.reshape(BM, 4) * weights_rep[:, :4],
                          axis=1, keepdims=True)                            # (BM, 1)
    wts_inter = weights_rep[:, 4:]                                          # (BM, 4)

    # ---- parameters prepped for the MXU (bf16 operands, constants folded)
    w1p = jnp.pad(params['w1'], ((0, 128 - 10), (0, 0))).astype(bf16)       # (128, 64)
    w2b = params['w2'].astype(bf16)                                         # (64, 256)
    w3s = (params['w3'] / float(Tm)).astype(bf16)                           # (256, 64), time-mean folded in

    kernel = _make_score_kernel(BM, N, Tm, H2)
    total = pl.pallas_call(
        kernel,
        out_shape=jax.ShapeDtypeStruct((BM, 1), f32),
        compiler_params=pltpu.CompilerParams(vmem_limit_bytes=64 * 1024 * 1024),
    )(attr_pad, hard_score, wts_inter, dsq, maskf10,
      w1p, params['b1'], w2b, params['b2'],
      w3s, params['b3'], params['w4'], params['b4'])

    scores = total.reshape(B, M)
    ego_mask = (jnp.sum(ego_traj, axis=(-1, -2)) != 0)                      # (B, M)
    scores = jnp.where(ego_mask, scores, jnp.float32(-1e9))
    return scores, weights


# ----------------------------- pure-JAX reference (for validation) -----------------------------

def ref_forward(params, ego_traj, ego_encoding, agents_traj, agents_states, timesteps):
    def linear(x, w, b): return x @ w + b
    def sigmoid(x): return 1.0 / (1.0 + jnp.exp(-x))

    B, M, T, _ = ego_traj.shape
    Tm = int(timesteps)

    speed = ego_traj[:, :, :Tm, 3]
    accel = ego_traj[:, :, :Tm, 4]
    jerk = jnp.diff(accel, axis=-1) / 0.1
    jerk = jnp.concatenate([jerk[:, :, :1], jerk], axis=-1)
    curv = ego_traj[:, :, :Tm, 5]
    lat = speed ** 2 * curv
    ego_feats = jnp.stack([
        -jnp.clip(speed.mean(-1), 0, 15) / 15,
        jnp.clip(jnp.abs(accel).mean(-1), 0, 4) / 4,
        jnp.clip(jnp.abs(jerk).mean(-1), 0, 6) / 6,
        jnp.clip(jnp.abs(lat).mean(-1), 0, 5) / 5], -1)                     # (B, M, 4)

    enc = jnp.ones_like(ego_encoding)
    weights = jax.nn.softplus(linear(_elu(linear(enc, params['w5'], params['b5'])),
                                     params['w6'], params['b6']))

    ego_mask = (ego_traj.sum(-1).sum(-1) != 0)
    agent_mask = (agents_states.sum(-1) != 0).astype(jnp.float32)           # (B, N)

    scores = []
    for i in range(M):
        e = ego_traj[:, i]
        a = agents_traj[:, i]
        rel_yaw = a[:, :, :Tm, 2] - e[:, None, :Tm, 2]
        rel_yaw = jnp.arctan2(jnp.sin(rel_yaw), jnp.cos(rel_yaw))
        rp = a[:, :, :Tm, :2] - e[:, None, :Tm, :2]
        rp = jnp.stack([rp[..., 0] * jnp.cos(rel_yaw), rp[..., 1] * jnp.sin(rel_yaw)], -1)
        av = jnp.diff(a[:, :, :Tm, :2], axis=-2) / 0.1
        av = jnp.concatenate([av[:, :, :1, :], av], axis=-2)
        evx = e[:, :Tm, 3] * jnp.cos(e[:, :Tm, 2])
        evy = e[:, :Tm, 3] * jnp.sin(e[:, :Tm, 2])
        rv = jnp.stack([(av[..., 0] - evx[:, None]) * jnp.cos(rel_yaw),
                        (av[..., 1] - evy[:, None]) * jnp.sin(rel_yaw)], -1)
        rel_attr = jnp.concatenate([rp, rel_yaw[..., None], rv], -1)
        ag_attr = jnp.broadcast_to(agents_states[:, :, None, 6:],
                                   rel_attr.shape[:3] + (agents_states.shape[-1] - 6,))
        attrs = jnp.concatenate([rel_attr, ag_attr], -1) * agent_mask[:, :, None, None]
        h = jnp.maximum(linear(attrs, params['w1'], params['b1']), 0.0)
        h = linear(h, params['w2'], params['b2'])
        h = h.max(1).mean(1)
        inter = sigmoid(linear(_elu(linear(h, params['w3'], params['b3'])),
                               params['w4'], params['b4']))
        feats = jnp.concatenate([ego_feats[:, i], inter], -1)
        score = -jnp.sum(feats * weights, -1)
        dist = jnp.linalg.norm(e[:, None, :Tm, :2] - a[:, :, :Tm, :2], axis=-1)
        cost = jnp.exp(-0.2 * dist ** 2) * agent_mask[:, :, None]
        score = score - 10 * cost.sum(-1).sum(-1)
        scores.append(score)
    scores = jnp.stack(scores, 1)
    scores = jnp.where(ego_mask, scores, jnp.float32(-1e9))
    return scores, weights


# ----------------------------- parameter init -----------------------------

def linear_init(key, fan_in, fan_out):
    kw, kb = jax.random.split(key)
    bound = 1.0 / (fan_in ** 0.5)
    w = jax.random.uniform(kw, (fan_in, fan_out), jnp.float32, -bound, bound)
    b = jax.random.uniform(kb, (1, fan_out), jnp.float32, -bound, bound)
    return w, b


def init_params(key):
    ks = jax.random.split(key, 6)
    p = {}
    p['w1'], p['b1'] = linear_init(ks[0], 10, 64)     # interaction_feature_encoder
    p['w2'], p['b2'] = linear_init(ks[1], 64, 256)
    p['w3'], p['b3'] = linear_init(ks[2], 256, 64)    # interaction_feature_decoder
    p['w4'], p['b4'] = linear_init(ks[3], 64, 4)
    p['w5'], p['b5'] = linear_init(ks[4], 256, 64)    # weights_decoder
    p['w6'], p['b6'] = linear_init(ks[5], 64, 8)      # n_latent_features + 4
    return p


# ----------------------------- main -----------------------------

if __name__ == "__main__":
    key = jax.random.PRNGKey(0)
    B, M, N, T, timesteps = 2, 3, 8, 20, 16
    ks = jax.random.split(key, 5)
    params = init_params(ks[0])

    ego_traj = jax.random.normal(ks[1], (B, M, T, 6), jnp.float32)
    ego_encoding = jax.random.normal(ks[2], (B, 256), jnp.float32)
    agents_traj = jax.random.normal(ks[3], (B, M, N, T, 3), jnp.float32)
    agents_states = jax.random.normal(ks[4], (B, N, 11), jnp.float32)
    # exercise the masks: one zeroed ego branch, two zeroed (invalid) agents
    ego_traj = ego_traj.at[1, 2].set(0.0)
    agents_states = agents_states.at[:, -2:].set(0.0)

    scores, weights = score_decoder_forward(params, ego_traj, ego_encoding,
                                            agents_traj, agents_states, timesteps)
    jax.block_until_ready((scores, weights))

    scores_ref, weights_ref = ref_forward(params, ego_traj, ego_encoding,
                                          agents_traj, agents_states, timesteps)
    np.testing.assert_allclose(np.asarray(weights), np.asarray(weights_ref),
                               rtol=2e-3, atol=2e-3)
    # bf16 MXU operands (f32 accumulation): loosen the score tolerance accordingly.
    np.testing.assert_allclose(np.asarray(scores), np.asarray(scores_ref),
                               rtol=2e-2, atol=1e-1)
    print("KERNEL_OK")
</pallas_src>

<mosaic_0001>
module attributes {stable_mosaic.version = 11 : i64} {
  func.func @score_kernel(%arg0: memref<768x128xbf16, #tpu.memory_space<vmem>>, %arg1: memref<6x1xf32, #tpu.memory_space<vmem>>, %arg2: memref<6x4xf32, #tpu.memory_space<vmem>>, %arg3: memref<6x128xf32, #tpu.memory_space<vmem>>, %arg4: memref<6x128xf32, #tpu.memory_space<vmem>>, %arg5: memref<128x64xbf16, #tpu.memory_space<vmem>>, %arg6: memref<1x64xf32, #tpu.memory_space<vmem>>, %arg7: memref<64x256xbf16, #tpu.memory_space<vmem>>, %arg8: memref<1x256xf32, #tpu.memory_space<vmem>>, %arg9: memref<256x64xbf16, #tpu.memory_space<vmem>>, %arg10: memref<1x64xf32, #tpu.memory_space<vmem>>, %arg11: memref<64x4xf32, #tpu.memory_space<vmem>>, %arg12: memref<1x4xf32, #tpu.memory_space<vmem>>, %arg13: memref<6x1xf32, #tpu.memory_space<vmem>>) attributes {dimension_semantics = [], scalar_prefetch = 0 : i64, scratch_operands = 0 : i64, tpu.core_type = #tpu.core_type<tc>} {
    %c0 = arith.constant 0 : index
    %c0_0 = arith.constant 0 : index
    %0 = vector.load %arg0[%c0, %c0_0] : memref<768x128xbf16, #tpu.memory_space<vmem>>, vector<768x128xbf16>
    %c0_1 = arith.constant 0 : index
    %c0_2 = arith.constant 0 : index
    %1 = vector.load %arg5[%c0_1, %c0_2] : memref<128x64xbf16, #tpu.memory_space<vmem>>, vector<128x64xbf16>
    %cst = arith.constant dense<0.000000e+00> : vector<768x64xf32>
    %2 = tpu.matmul %0, %1, %cst {dimension_numbers = #tpu.dot_dimension_numbers<[1], [0], [0], [1], [0, 0, 1, 1], [], []>} : vector<768x128xbf16>, vector<128x64xbf16>, vector<768x64xf32> -> vector<768x64xf32>
    %c0_3 = arith.constant 0 : index
    %c0_4 = arith.constant 0 : index
    %3 = vector.load %arg6[%c0_3, %c0_4] : memref<1x64xf32, #tpu.memory_space<vmem>>, vector<1x64xf32>
    %4 = vector.broadcast %3 : vector<1x64xf32> to vector<768x64xf32>
    %5 = arith.addf %2, %4 : vector<768x64xf32>
    %cst_5 = arith.constant 0.000000e+00 : f32
    %6 = vector.broadcast %cst_5 : f32 to vector<768x64xf32>
    %7 = arith.maximumf %5, %6 : vector<768x64xf32>
    %8 = arith.truncf %7 : vector<768x64xf32> to vector<768x64xbf16>
    %c0_6 = arith.constant 0 : index
    %c0_7 = arith.constant 0 : index
    %9 = vector.load %arg7[%c0_6, %c0_7] : memref<64x256xbf16, #tpu.memory_space<vmem>>, vector<64x256xbf16>
    %cst_8 = arith.constant dense<0.000000e+00> : vector<768x256xf32>
    %10 = tpu.matmul %8, %9, %cst_8 {dimension_numbers = #tpu.dot_dimension_numbers<[1], [0], [0], [1], [0, 0, 1, 1], [], []>} : vector<768x64xbf16>, vector<64x256xbf16>, vector<768x256xf32> -> vector<768x256xf32>
    %c0_9 = arith.constant 0 : index
    %c0_10 = arith.constant 0 : index
    %11 = vector.load %arg8[%c0_9, %c0_10] : memref<1x256xf32, #tpu.memory_space<vmem>>, vector<1x256xf32>
    %12 = vector.broadcast %11 : vector<1x256xf32> to vector<768x256xf32>
    %13 = arith.addf %10, %12 : vector<768x256xf32>
    %14 = vector.shape_cast %13 : vector<768x256xf32> to vector<6x8x16x256xf32>
    %cst_11 = arith.constant dense<0xFF800000> : vector<6x16x256xf32>
    %15 = vector.multi_reduction <maximumf>, %14, %cst_11 [1] : vector<6x8x16x256xf32> to vector<6x16x256xf32>
    %cst_12 = arith.constant dense<0.000000e+00> : vector<6x256xf32>
    %16 = vector.multi_reduction <add>, %15, %cst_12 [1] : vector<6x16x256xf32> to vector<6x256xf32>
    %17 = arith.truncf %16 : vector<6x256xf32> to vector<6x256xbf16>
    %c0_13 = arith.constant 0 : index
    %c0_14 = arith.constant 0 : index
    %18 = vector.load %arg9[%c0_13, %c0_14] : memref<256x64xbf16, #tpu.memory_space<vmem>>, vector<256x64xbf16>
    %cst_15 = arith.constant dense<0.000000e+00> : vector<6x64xf32>
    %19 = tpu.matmul %17, %18, %cst_15 {dimension_numbers = #tpu.dot_dimension_numbers<[1], [0], [0], [1], [0, 0, 1, 1], [], []>} : vector<6x256xbf16>, vector<256x64xbf16>, vector<6x64xf32> -> vector<6x64xf32>
    %c0_16 = arith.constant 0 : index
    %c0_17 = arith.constant 0 : index
    %20 = vector.load %arg10[%c0_16, %c0_17] : memref<1x64xf32, #tpu.memory_space<vmem>>, vector<1x64xf32>
    %21 = vector.broadcast %20 : vector<1x64xf32> to vector<6x64xf32>
    %22 = arith.addf %19, %21 : vector<6x64xf32>
    %cst_18 = arith.constant 0.000000e+00 : f32
    %23 = vector.broadcast %cst_18 : f32 to vector<6x64xf32>
    %24 = arith.cmpf ogt, %22, %23 : vector<6x64xf32>
    %cst_19 = arith.constant 0.000000e+00 : f32
    %25 = vector.broadcast %cst_19 : f32 to vector<6x64xf32>
    %26 = arith.minimumf %22, %25 : vector<6x64xf32>
    %27 = math.exp %26 : vector<6x64xf32>
    %cst_20 = arith.constant 1.000000e+00 : f32
    %28 = vector.broadcast %cst_20 : f32 to vector<6x64xf32>
    %29 = arith.subf %27, %28 : vector<6x64xf32>
    %30 = arith.select %24, %22, %29 : vector<6x64xi1>, vector<6x64xf32>
    %c0_21 = arith.constant 0 : index
    %c0_22 = arith.constant 0 : index
    %31 = vector.load %arg11[%c0_21, %c0_22] : memref<64x4xf32, #tpu.memory_space<vmem>>, vector<64x4xf32>
    %cst_23 = arith.constant dense<0.000000e+00> : vector<6x4xf32>
    %32 = tpu.matmul %30, %31, %cst_23 {dimension_numbers = #tpu.dot_dimension_numbers<[1], [0], [0], [1], [0, 0, 1, 1], [], []>} : vector<6x64xf32>, vector<64x4xf32>, vector<6x4xf32> -> vector<6x4xf32>
    %c0_24 = arith.constant 0 : index
    %c0_25 = arith.constant 0 : index
    %33 = vector.load %arg12[%c0_24, %c0_25] : memref<1x4xf32, #tpu.memory_space<vmem>>, vector<1x4xf32>
    %34 = vector.broadcast %33 : vector<1x4xf32> to vector<6x4xf32>
    %35 = arith.addf %32, %34 : vector<6x4xf32>
    %cst_26 = arith.constant 0.000000e+00 : f32
    %36 = vector.broadcast %cst_26 : f32 to vector<6x4xf32>
    %37 = arith.subf %36, %35 : vector<6x4xf32>
    %38 = math.exp %37 : vector<6x4xf32>
    %cst_27 = arith.constant 1.000000e+00 : f32
    %39 = vector.broadcast %cst_27 : f32 to vector<6x4xf32>
    %40 = arith.addf %39, %38 : vector<6x4xf32>
    %cst_28 = arith.constant 1.000000e+00 : f32
    %41 = vector.broadcast %cst_28 : f32 to vector<6x4xf32>
    %42 = arith.divf %41, %40 : vector<6x4xf32>
    %c0_29 = arith.constant 0 : index
    %c0_30 = arith.constant 0 : index
    %43 = vector.load %arg2[%c0_29, %c0_30] : memref<6x4xf32, #tpu.memory_space<vmem>>, vector<6x4xf32>
    %44 = arith.mulf %42, %43 : vector<6x4xf32>
    %cst_31 = arith.constant dense<0.000000e+00> : vector<6xf32>
    %45 = vector.multi_reduction <add>, %44, %cst_31 [1] : vector<6x4xf32> to vector<6xf32>
    %46 = vector.shape_cast %45 : vector<6xf32> to vector<6x1xf32>
    %c0_32 = arith.constant 0 : index
    %c0_33 = arith.constant 0 : index
    %47 = vector.load %arg3[%c0_32, %c0_33] : memref<6x128xf32, #tpu.memory_space<vmem>>, vector<6x128xf32>
    %cst_34 = arith.constant -2.000000e-01 : f32
    %48 = vector.broadcast %cst_34 : f32 to vector<6x128xf32>
    %49 = arith.mulf %48, %47 : vector<6x128xf32>
    %50 = math.exp %49 : vector<6x128xf32>
    %c0_35 = arith.constant 0 : index
    %c0_36 = arith.constant 0 : index
    %51 = vector.load %arg4[%c0_35, %c0_36] : memref<6x128xf32, #tpu.memory_space<vmem>>, vector<6x128xf32>
    %52 = arith.mulf %50, %51 : vector<6x128xf32>
    %cst_37 = arith.constant dense<0.000000e+00> : vector<6xf32>
    %53 = vector.multi_reduction <add>, %52, %cst_37 [1] : vector<6x128xf32> to vector<6xf32>
    %54 = vector.shape_cast %53 : vector<6xf32> to vector<6x1xf32>
    %c0_38 = arith.constant 0 : index
    %c0_39 = arith.constant 0 : index
    %55 = vector.load %arg1[%c0_38, %c0_39] : memref<6x1xf32, #tpu.memory_space<vmem>>, vector<6x1xf32>
    %56 = arith.subf %55, %46 : vector<6x1xf32>
    %57 = arith.subf %56, %54 : vector<6x1xf32>
    %c0_40 = arith.constant 0 : index
    %c0_41 = arith.constant 0 : index
    %58 = vector.load %arg13[%c0_40, %c0_41] : memref<6x1xf32, #tpu.memory_space<vmem>>, vector<6x1xf32>
    tpu.vector_store %arg13[%c0_40, %c0_41], %57 {strides = array<i32>} : memref<6x1xf32, #tpu.memory_space<vmem>>, vector<6x1xf32>,
    return
  }
}

</mosaic_0001>

<llo_original>
// kernel: score_decoder_forward.1
$region0: #{score_decoder_forward.1}
  #allocation0 [shape = 'u32[]', space=smem, size = 0x4, offset = 0x4, fixed_abs, tag = 'smem constant byte address 0x4 - core index']
  #allocation1 [shape = 'u32[144,128]{1,0:T(1,128)}', space=vmem, size = 0x12000, scoped, tag = 'internal scratch']
  %s0 = inlined_call_operand.hbm [shape: bf16[768,128], index: 0, kind: input, shape index: {}]
  %s1 = inlined_call_operand.hbm [shape: f32[6,1], index: 1, kind: input, shape index: {}]
  %s2 = inlined_call_operand.hbm [shape: f32[6,4], index: 2, kind: input, shape index: {}]
  %s3 = inlined_call_operand.hbm [shape: f32[6,128], index: 3, kind: input, shape index: {}]
  %s4 = inlined_call_operand.hbm [shape: f32[6,128], index: 4, kind: input, shape index: {}]
  %s5 = inlined_call_operand.hbm [shape: bf16[128,64], index: 5, kind: input, shape index: {}]
  %s6 = inlined_call_operand.hbm [shape: f32[1,64], index: 6, kind: input, shape index: {}]
  %s7 = inlined_call_operand.hbm [shape: bf16[64,256], index: 7, kind: input, shape index: {}]
  %s8 = inlined_call_operand.hbm [shape: f32[1,256], index: 8, kind: input, shape index: {}]
  %s9 = inlined_call_operand.hbm [shape: bf16[256,64], index: 9, kind: input, shape index: {}]
  %s10 = inlined_call_operand.hbm [shape: f32[1,64], index: 10, kind: input, shape index: {}]
  %s11 = inlined_call_operand.hbm [shape: f32[64,4], index: 11, kind: input, shape index: {}]
  %s12 = inlined_call_operand.hbm [shape: f32[1,4], index: 12, kind: input, shape index: {}]
  %s13 = inlined_call_operand.hbm [shape: f32[6,1], index: 13, kind: output, shape index: {}]
  %s14 = sld [smem:[#allocation0]]
  $region114: #{score_decoder_forward.1} parent=0
    _
  %s16 = ssub.s32 1, %s14
  %s17 = scalar_select 0, %s16, %s14
  $region1: #{score_decoder_forward.1} parent=0
    #allocation2 [shape = 'u8[196608]{0}', space=vmem, size = 0x30000, scoped, tag = 'input window, operand 0, single buffered']
    #allocation3 [shape = 's32[1]{0}', space=sflag, size = 0x4, scoped, tag = 'scoped memory for score_decoder_forward.1']
    #allocation4 [shape = 's32[1]{0}', space=sflag, size = 0x4, scoped, tag = 'scoped memory for score_decoder_forward.1']
    #allocation5 [shape = 'u8[4096]{0}', space=vmem, size = 0x1000, scoped, tag = 'input window, operand 1, single buffered']
    #allocation6 [shape = 's32[1]{0}', space=sflag, size = 0x4, scoped, tag = 'scoped memory for score_decoder_forward.1']
    #allocation7 [shape = 'u8[4096]{0}', space=vmem, size = 0x1000, scoped, tag = 'input window, operand 2, single buffered']
    #allocation8 [shape = 'u8[4096]{0}', space=vmem, size = 0x1000, scoped, tag = 'input window, operand 3, single buffered']
    #allocation9 [shape = 's32[1]{0}', space=sflag, size = 0x4, scoped, tag = 'scoped memory for score_decoder_forward.1']
    #allocation10 [shape = 'u8[4096]{0}', space=vmem, size = 0x1000, scoped, tag = 'input window, operand 4, single buffered']
    #allocation11 [shape = 'u8[32768]{0}', space=vmem, size = 0x8000, scoped, tag = 'input window, operand 5, single buffered']
    #allocation12 [shape = 's32[1]{0}', space=sflag, size = 0x4, scoped, tag = 'scoped memory for score_decoder_forward.1']
    #allocation13 [shape = 'u8[512]{0}', space=vmem, size = 0x400, scoped, tag = 'input window, operand 6, single buffered']
    #allocation14 [shape = 'u8[32768]{0}', space=vmem, size = 0x8000, scoped, tag = 'input window, operand 7, single buffered']
    #allocation15 [shape = 's32[1]{0}', space=sflag, size = 0x4, scoped, tag = 'scoped memory for score_decoder_forward.1']
    #allocation16 [shape = 'u8[1024]{0}', space=vmem, size = 0x400, scoped, tag = 'input window, operand 8, single buffered']
    #allocation17 [shape = 'u8[65536]{0}', space=vmem, size = 0x10000, scoped, tag = 'input window, operand 9, single buffered']
    #allocation18 [shape = 's32[1]{0}', space=sflag, size = 0x4, scoped, tag = 'scoped memory for score_decoder_forward.1']
    #allocation19 [shape = 'u8[512]{0}', space=vmem, size = 0x400, scoped, tag = 'input window, operand 10, single buffered']
    #allocation20 [shape = 'u8[32768]{0}', space=vmem, size = 0x8000, scoped, tag = 'input window, operand 11, single buffered']
    #allocation21 [shape = 's32[1]{0}', space=sflag, size = 0x4, scoped, tag = 'scoped memory for score_decoder_forward.1']
    #allocation22 [shape = 'u8[512]{0}', space=vmem, size = 0x400, scoped, tag = 'input window, operand 12, single buffered']
    #allocation23 [shape = 'u8[4096]{0}', space=vmem, size = 0x1000, scoped, tag = 'output window, operand 0, single buffered']
    %18 = vsyncpa [#allocation3], 0
    %19 = vsyncpa [#allocation6], 0
    %20 = vsyncpa [#allocation9], 0
    %21 = vsyncpa [#allocation12], 0
    %22 = vsyncpa [#allocation15], 0
    %23 = vsyncpa [#allocation18], 0
    %24 = vsyncpa [#allocation21], 0
    %25 = vsyncpa [#allocation4], 0
    // Predicated region
    $region2: #{score_decoder_forward.1} parent=1 // pred_check
      _
    $region3: #{score_decoder_forward.1} parent=1 // pred_check_branch
      %27 = sbr.rel (0) target = $region5
    $region4: #{score_decoder_forward.1} parent=1 // pred_region
      %s29 = ssub.s32 6144, 6144
      %30 = vsyncadd [#allocation3], %s29
      %s31 = sshll.u32 [#allocation2], 4
      %s32 = int_to_ptr.vmem [resolvable:$true] %s31
      %37 = dma.hbm_to_vmem [thread:$0]  %s0, 6144, %s32, [#allocation3], 64, 64, 4
    $region5: #{score_decoder_forward.1} parent=1 // pred_fallthru
      _
    // Predicated region
    $region6: #{score_decoder_forward.1} parent=1 // pred_check
      _
    $region7: #{score_decoder_forward.1} parent=1 // pred_check_branch
      %39 = sbr.rel (0) target = $region9
    $region8: #{score_decoder_forward.1} parent=1 // pred_region
      %s41 = ssub.s32 128, 128
      %42 = vsyncadd [#allocation6], %s41
      %s44 = sshll.u32 [#allocation5], 4
      %s45 = int_to_ptr.vmem [resolvable:$true] %s44
      %47 = dma.hbm_to_vmem [thread:$0]  %s1, 128, %s45, [#allocation6]
    $region9: #{score_decoder_forward.1} parent=1 // pred_fallthru
      _
    // Predicated region
    $region10: #{score_decoder_forward.1} parent=1 // pred_check
      _
    $region11: #{score_decoder_forward.1} parent=1 // pred_check_branch
      %49 = sbr.rel (0) target = $region13
    $region12: #{score_decoder_forward.1} parent=1 // pred_region
      %s51 = ssub.s32 128, 128
      %52 = vsyncadd [#allocation6], %s51
      %s54 = sshll.u32 [#allocation7], 4
      %s55 = int_to_ptr.vmem [resolvable:$true] %s54
      %57 = dma.hbm_to_vmem [thread:$0]  %s2, 128, %s55, [#allocation6]
    $region13: #{score_decoder_forward.1} parent=1 // pred_fallthru
      _
    // Predicated region
    $region14: #{score_decoder_forward.1} parent=1 // pred_check
      _
    $region15: #{score_decoder_forward.1} parent=1 // pred_check_branch
      %59 = sbr.rel (0) target = $region17
    $region16: #{score_decoder_forward.1} parent=1 // pred_region
      %s61 = ssub.s32 128, 128
      %62 = vsyncadd [#allocation9], %s61
      %s64 = sshll.u32 [#allocation8], 4
      %s65 = int_to_ptr.vmem [resolvable:$true] %s64
      %67 = dma.hbm_to_vmem [thread:$0]  %s3, 128, %s65, [#allocation9]
    $region17: #{score_decoder_forward.1} parent=1 // pred_fallthru
      _
    // Predicated region
    $region18: #{score_decoder_forward.1} parent=1 // pred_check
      _
    $region19: #{score_decoder_forward.1} parent=1 // pred_check_branch
      %69 = sbr.rel (0) target = $region21
    $region20: #{score_decoder_forward.1} parent=1 // pred_region
      %s71 = ssub.s32 128, 128
      %72 = vsyncadd [#allocation9], %s71
      %s74 = sshll.u32 [#allocation10], 4
      %s75 = int_to_ptr.vmem [resolvable:$true] %s74
      %77 = dma.hbm_to_vmem [thread:$0]  %s4, 128, %s75, [#allocation9]
    $region21: #{score_decoder_forward.1} parent=1 // pred_fallthru
      _
    // Predicated region
    $region22: #{score_decoder_forward.1} parent=1 // pred_check
      _
    $region23: #{score_decoder_forward.1} parent=1 // pred_check_branch
      %79 = sbr.rel (0) target = $region25
    $region24: #{score_decoder_forward.1} parent=1 // pred_region
      %s81 = ssub.s32 1024, 1024
      %82 = vsyncadd [#allocation12], %s81
      %s83 = sshll.u32 [#allocation11], 4
      %s84 = int_to_ptr.vmem [resolvable:$true] %s83
      %89 = dma.hbm_to_vmem [thread:$0]  %s5, 1024, %s84, [#allocation12], 64, 64, 4
    $region25: #{score_decoder_forward.1} parent=1 // pred_fallthru
      _
    // Predicated region
    $region26: #{score_decoder_forward.1} parent=1 // pred_check
      _
    $region27: #{score_decoder_forward.1} parent=1 // pred_check_branch
      %91 = sbr.rel (0) target = $region29
    $region28: #{score_decoder_forward.1} parent=1 // pred_region
      %s93 = ssub.s32 16, 16
      %94 = vsyncadd [#allocation12], %s93
      %s96 = sshll.u32 [#allocation13], 4
      %s97 = int_to_ptr.vmem [resolvable:$true] %s96
      %99 = dma.hbm_to_vmem [thread:$0]  %s6, 16, %s97, [#allocation12]
    $region29: #{score_decoder_forward.1} parent=1 // pred_fallthru
      _
    // Predicated region
    $region30: #{score_decoder_forward.1} parent=1 // pred_check
      _
    $region31: #{score_decoder_forward.1} parent=1 // pred_check_branch
      %101 = sbr.rel (0) target = $region33
    $region32: #{score_decoder_forward.1} parent=1 // pred_region
      %s103 = ssub.s32 1024, 1024
      %104 = vsyncadd [#allocation15], %s103
      %s105 = sshll.u32 [#allocation14], 4
      %s106 = int_to_ptr.vmem [resolvable:$true] %s105
      %111 = dma.hbm_to_vmem [thread:$0]  %s7, 1024, %s106, [#allocation15], 128, 128, 8
    $region33: #{score_decoder_forward.1} parent=1 // pred_fallthru
      _
    // Predicated region
    $region34: #{score_decoder_forward.1} parent=1 // pred_check
      _
    $region35: #{score_decoder_forward.1} parent=1 // pred_check_branch
      %113 = sbr.rel (0) target = $region37
    $region36: #{score_decoder_forward.1} parent=1 // pred_region
      %s115 = ssub.s32 32, 32
      %116 = vsyncadd [#allocation15], %s115
      %s118 = sshll.u32 [#allocation16], 4
      %s119 = int_to_ptr.vmem [resolvable:$true] %s118
      %121 = dma.hbm_to_vmem [thread:$0]  %s8, 32, %s119, [#allocation15]
    $region37: #{score_decoder_forward.1} parent=1 // pred_fallthru
      _
    // Predicated region
    $region38: #{score_decoder_forward.1} parent=1 // pred_check
      _
    $region39: #{score_decoder_forward.1} parent=1 // pred_check_branch
      %123 = sbr.rel (0) target = $region41
    $region40: #{score_decoder_forward.1} parent=1 // pred_region
      %s125 = ssub.s32 2048, 2048
      %126 = vsyncadd [#allocation18], %s125
      %s127 = sshll.u32 [#allocation17], 4
      %s128 = int_to_ptr.vmem [resolvable:$true] %s127
      %133 = dma.hbm_to_vmem [thread:$0]  %s9, 2048, %s128, [#allocation18], 64, 64, 4
    $region41: #{score_decoder_forward.1} parent=1 // pred_fallthru
      _
    // Predicated region
    $region42: #{score_decoder_forward.1} parent=1 // pred_check
      _
    $region43: #{score_decoder_forward.1} parent=1 // pred_check_branch
      %135 = sbr.rel (0) target = $region45
    $region44: #{score_decoder_forward.1} parent=1 // pred_region
      %s137 = ssub.s32 16, 16
      %138 = vsyncadd [#allocation18], %s137
      %s140 = sshll.u32 [#allocation19], 4
      %s141 = int_to_ptr.vmem [resolvable:$true] %s140
      %143 = dma.hbm_to_vmem [thread:$0]  %s10, 16, %s141, [#allocation18]
    $region45: #{score_decoder_forward.1} parent=1 // pred_fallthru
      _
    // Predicated region
    $region46: #{score_decoder_forward.1} parent=1 // pred_check
      _
    $region47: #{score_decoder_forward.1} parent=1 // pred_check_branch
      %145 = sbr.rel (0) target = $region49
    $region48: #{score_decoder_forward.1} parent=1 // pred_region
      %s147 = ssub.s32 1024, 1024
      %148 = vsyncadd [#allocation21], %s147
      %s149 = sshll.u32 [#allocation20], 4
      %s150 = int_to_ptr.vmem [resolvable:$true] %s149
      %155 = dma.hbm_to_vmem [thread:$0]  %s11, 1024, %s150, [#allocation21], 128, 128, 8
    $region49: #{score_decoder_forward.1} parent=1 // pred_fallthru
      _
    // Predicated region
    $region50: #{score_decoder_forward.1} parent=1 // pred_check
      _
    $region51: #{score_decoder_forward.1} parent=1 // pred_check_branch
      %157 = sbr.rel (0) target = $region53
    $region52: #{score_decoder_forward.1} parent=1 // pred_region
      %s159 = ssub.s32 16, 16
      %160 = vsyncadd [#allocation21], %s159
      %s162 = sshll.u32 [#allocation22], 4
      %s163 = int_to_ptr.vmem [resolvable:$true] %s162
      %165 = dma.hbm_to_vmem [thread:$0]  %s12, 16, %s163, [#allocation21]
    $region53: #{score_decoder_forward.1} parent=1 // pred_fallthru
      _
    // Predicated region
    $region54: #{score_decoder_forward.1} parent=1 // pred_check
      _
    $region55: #{score_decoder_forward.1} parent=1 // pred_check_branch
      %167 = sbr.rel (0) target = $region57
    $region56: #{score_decoder_forward.1} parent=1 // pred_region
      %168 = dma.done [#allocation3], 6144
    $region57: #{score_decoder_forward.1} parent=1 // pred_fallthru
      _
    // Predicated region
    $region58: #{score_decoder_forward.1} parent=1 // pred_check
      _
    $region59: #{score_decoder_forward.1} parent=1 // pred_check_branch
      %170 = sbr.rel (0) target = $region61
    $region60: #{score_decoder_forward.1} parent=1 // pred_region
      %171 = dma.done [#allocation6], 128
    $region61: #{score_decoder_forward.1} parent=1 // pred_fallthru
      _
    // Predicated region
    $region62: #{score_decoder_forward.1} parent=1 // pred_check
      _
    $region63: #{score_decoder_forward.1} parent=1 // pred_check_branch
      %173 = sbr.rel (0) target = $region65
    $region64: #{score_decoder_forward.1} parent=1 // pred_region
      %174 = dma.done [#allocation6], 128
    $region65: #{score_decoder_forward.1} parent=1 // pred_fallthru
      _
    // Predicated region
    $region66: #{score_decoder_forward.1} parent=1 // pred_check
      _
    $region67: #{score_decoder_forward.1} parent=1 // pred_check_branch
      %176 = sbr.rel (0) target = $region69
    $region68: #{score_decoder_forward.1} parent=1 // pred_region
      %177 = dma.done [#allocation9], 128
    $region69: #{score_decoder_forward.1} parent=1 // pred_fallthru
      _
    // Predicated region
    $region70: #{score_decoder_forward.1} parent=1 // pred_check
      _
    $region71: #{score_decoder_forward.1} parent=1 // pred_check_branch
      %179 = sbr.rel (0) target = $region73
    $region72: #{score_decoder_forward.1} parent=1 // pred_region
      %180 = dma.done [#allocation9], 128
    $region73: #{score_decoder_forward.1} parent=1 // pred_fallthru
      _
    // Predicated region
    $region74: #{score_decoder_forward.1} parent=1 // pred_check
      _
    $region75: #{score_decoder_forward.1} parent=1 // pred_check_branch
      %182 = sbr.rel (0) target = $region77
    $region76: #{score_decoder_forward.1} parent=1 // pred_region
      %183 = dma.done [#allocation12], 1024
    $region77: #{score_decoder_forward.1} parent=1 // pred_fallthru
      _
    // Predicated region
    $region78: #{score_decoder_forward.1} parent=1 // pred_check
      _
    $region79: #{score_decoder_forward.1} parent=1 // pred_check_branch
      %185 = sbr.rel (0) target = $region81
    $region80: #{score_decoder_forward.1} parent=1 // pred_region
      %186 = dma.done [#allocation12], 16
    $region81: #{score_decoder_forward.1} parent=1 // pred_fallthru
      _
    // Predicated region
    $region82: #{score_decoder_forward.1} parent=1 // pred_check
      _
    $region83: #{score_decoder_forward.1} parent=1 // pred_check_branch
      %188 = sbr.rel (0) target = $region85
    $region84: #{score_decoder_forward.1} parent=1 // pred_region
      %189 = dma.done [#allocation15], 1024
    $region85: #{score_decoder_forward.1} parent=1 // pred_fallthru
      _
    // Predicated region
    $region86: #{score_decoder_forward.1} parent=1 // pred_check
      _
    $region87: #{score_decoder_forward.1} parent=1 // pred_check_branch
      %191 = sbr.rel (0) target = $region89
    $region88: #{score_decoder_forward.1} parent=1 // pred_region
      %192 = dma.done [#allocation15], 32
    $region89: #{score_decoder_forward.1} parent=1 // pred_fallthru
      _
    // Predicated region
    $region90: #{score_decoder_forward.1} parent=1 // pred_check
      _
    $region91: #{score_decoder_forward.1} parent=1 // pred_check_branch
      %194 = sbr.rel (0) target = $region93
    $region92: #{score_decoder_forward.1} parent=1 // pred_region
      %195 = dma.done [#allocation18], 2048
    $region93: #{score_decoder_forward.1} parent=1 // pred_fallthru
      _
    // Predicated region
    $region94: #{score_decoder_forward.1} parent=1 // pred_check
      _
    $region95: #{score_decoder_forward.1} parent=1 // pred_check_branch
      %197 = sbr.rel (0) target = $region97
    $region96: #{score_decoder_forward.1} parent=1 // pred_region
      %198 = dma.done [#allocation18], 16
    $region97: #{score_decoder_forward.1} parent=1 // pred_fallthru
      _
    // Predicated region
    $region98: #{score_decoder_forward.1} parent=1 // pred_check
      _
    $region99: #{score_decoder_forward.1} parent=1 // pred_check_branch
      %200 = sbr.rel (0) target = $region101
    $region100: #{score_decoder_forward.1} parent=1 // pred_region
      %201 = dma.done [#allocation21], 1024
    $region101: #{score_decoder_forward.1} parent=1 // pred_fallthru
      _
    // Predicated region
    $region102: #{score_decoder_forward.1} parent=1 // pred_check
      _
    $region103: #{score_decoder_forward.1} parent=1 // pred_check_branch
      %203 = sbr.rel (0) target = $region105
    $region104: #{score_decoder_forward.1} parent=1 // pred_region
      %204 = dma.done [#allocation21], 16
    $region105: #{score_decoder_forward.1} parent=1 // pred_fallthru
      _
    %v206 = vld [vmem:[#allocation2] sm:$0xf]
    %v207 = vld [vmem:[#allocation2 + $0x4] sm:$0xf]
    %v208 = vld [vmem:[#allocation2 + $0x8] sm:$0xf]
    %v209 = vld [vmem:[#allocation2 + $0xc] sm:$0xf]
    %v210 = vld [vmem:[#allocation2 + $0x10] sm:$0xf]
    %v211 = vld [vmem:[#allocation2 + $0x14] sm:$0xf]
    %v212 = vld [vmem:[#allocation2 + $0x18] sm:$0xf]
    %v213 = vld [vmem:[#allocation2 + $0x1c] sm:$0xf]
    %v214 = vld [vmem:[#allocation2 + $0x20] sm:$0xf]
    %v215 = vld [vmem:[#allocation2 + $0x24] sm:$0xf]
    %v216 = vld [vmem:[#allocation2 + $0x28] sm:$0xf]
    %v217 = vld [vmem:[#allocation2 + $0x2c] sm:$0xf]
    %v218 = vld [vmem:[#allocation2 + $0x30] sm:$0xf]
    %v219 = vld [vmem:[#allocation2 + $0x34] sm:$0xf]
    %v220 = vld [vmem:[#allocation2 + $0x38] sm:$0xf]
    %v221 = vld [vmem:[#allocation2 + $0x3c] sm:$0xf]
    %v222 = vld [vmem:[#allocation2 + $0x40] sm:$0xf]
    %v223 = vld [vmem:[#allocation2 + $0x44] sm:$0xf]
    %v224 = vld [vmem:[#allocation2 + $0x48] sm:$0xf]
    %v225 = vld [vmem:[#allocation2 + $0x4c] sm:$0xf]
    %v226 = vld [vmem:[#allocation2 + $0x50] sm:$0xf]
    %v227 = vld [vmem:[#allocation2 + $0x54] sm:$0xf]
    %v228 = vld [vmem:[#allocation2 + $0x58] sm:$0xf]
    %v229 = vld [vmem:[#allocation2 + $0x5c] sm:$0xf]
    %v230 = vld [vmem:[#allocation2 + $0x60] sm:$0xf]
    %v231 = vld [vmem:[#allocation2 + $0x64] sm:$0xf]
    %v232 = vld [vmem:[#allocation2 + $0x68] sm:$0xf]
    %v233 = vld [vmem:[#allocation2 + $0x6c] sm:$0xf]
    %v234 = vld [vmem:[#allocation2 + $0x70] sm:$0xf]
    %v235 = vld [vmem:[#allocation2 + $0x74] sm:$0xf]
    %v236 = vld [vmem:[#allocation2 + $0x78] sm:$0xf]
    %v237 = vld [vmem:[#allocation2 + $0x7c] sm:$0xf]
    %v238 = vld [vmem:[#allocation2 + $0x80] sm:$0xf]
    %v239 = vld [vmem:[#allocation2 + $0x84] sm:$0xf]
    %v240 = vld [vmem:[#allocation2 + $0x88] sm:$0xf]
    %v241 = vld [vmem:[#allocation2 + $0x8c] sm:$0xf]
    %v242 = vld [vmem:[#allocation2 + $0x90] sm:$0xf]
    %v243 = vld [vmem:[#allocation2 + $0x94] sm:$0xf]
    %v244 = vld [vmem:[#allocation2 + $0x98] sm:$0xf]
    %v245 = vld [vmem:[#allocation2 + $0x9c] sm:$0xf]
    %v246 = vld [vmem:[#allocation2 + $0xa0] sm:$0xf]
    %v247 = vld [vmem:[#allocation2 + $0xa4] sm:$0xf]
    %v248 = vld [vmem:[#allocation2 + $0xa8] sm:$0xf]
    %v249 = vld [vmem:[#allocation2 + $0xac] sm:$0xf]
    %v250 = vld [vmem:[#allocation2 + $0xb0] sm:$0xf]
    %v251 = vld [vmem:[#allocation2 + $0xb4] sm:$0xf]
    %v252 = vld [vmem:[#allocation2 + $0xb8] sm:$0xf]
    %v253 = vld [vmem:[#allocation2 + $0xbc] sm:$0xf]
    %v254 = vld [vmem:[#allocation2 + $0xc0] sm:$0xf]
    %v255 = vld [vmem:[#allocation2 + $0xc4] sm:$0xf]
    %v256 = vld [vmem:[#allocation2 + $0xc8] sm:$0xf]
    %v257 = vld [vmem:[#allocation2 + $0xcc] sm:$0xf]
    %v258 = vld [vmem:[#allocation2 + $0xd0] sm:$0xf]
    %v259 = vld [vmem:[#allocation2 + $0xd4] sm:$0xf]
    %v260 = vld [vmem:[#allocation2 + $0xd8] sm:$0xf]
    %v261 = vld [vmem:[#allocation2 + $0xdc] sm:$0xf]
    %v262 = vld [vmem:[#allocation2 + $0xe0] sm:$0xf]
    %v263 = vld [vmem:[#allocation2 + $0xe4] sm:$0xf]
    %v264 = vld [vmem:[#allocation2 + $0xe8] sm:$0xf]
    %v265 = vld [vmem:[#allocation2 + $0xec] sm:$0xf]
    %v266 = vld [vmem:[#allocation2 + $0xf0] sm:$0xf]
    %v267 = vld [vmem:[#allocation2 + $0xf4] sm:$0xf]
    %v268 = vld [vmem:[#allocation2 + $0xf8] sm:$0xf]
    %v269 = vld [vmem:[#allocation2 + $0xfc] sm:$0xf]
    %v270 = vld [vmem:[#allocation2 + $0x100] sm:$0xf]
    %v271 = vld [vmem:[#allocation2 + $0x104] sm:$0xf]
    %v272 = vld [vmem:[#allocation2 + $0x108] sm:$0xf]
    %v273 = vld [vmem:[#allocation2 + $0x10c] sm:$0xf]
    %v274 = vld [vmem:[#allocation2 + $0x110] sm:$0xf]
    %v275 = vld [vmem:[#allocation2 + $0x114] sm:$0xf]
    %v276 = vld [vmem:[#allocation2 + $0x118] sm:$0xf]
    %v277 = vld [vmem:[#allocation2 + $0x11c] sm:$0xf]
    %v278 = vld [vmem:[#allocation2 + $0x120] sm:$0xf]
    %v279 = vld [vmem:[#allocation2 + $0x124] sm:$0xf]
    %v280 = vld [vmem:[#allocation2 + $0x128] sm:$0xf]
    %v281 = vld [vmem:[#allocation2 + $0x12c] sm:$0xf]
    %v282 = vld [vmem:[#allocation2 + $0x130] sm:$0xf]
    %v283 = vld [vmem:[#allocation2 + $0x134] sm:$0xf]
    %v284 = vld [vmem:[#allocation2 + $0x138] sm:$0xf]
    %v285 = vld [vmem:[#allocation2 + $0x13c] sm:$0xf]
    %v286 = vld [vmem:[#allocation2 + $0x140] sm:$0xf]
    %v287 = vld [vmem:[#allocation2 + $0x144] sm:$0xf]
    %v288 = vld [vmem:[#allocation2 + $0x148] sm:$0xf]
    %v289 = vld [vmem:[#allocation2 + $0x14c] sm:$0xf]
    %v290 = vld [vmem:[#allocation2 + $0x150] sm:$0xf]
    %v291 = vld [vmem:[#allocation2 + $0x154] sm:$0xf]
    %v292 = vld [vmem:[#allocation2 + $0x158] sm:$0xf]
    %v293 = vld [vmem:[#allocation2 + $0x15c] sm:$0xf]
    %v294 = vld [vmem:[#allocation2 + $0x160] sm:$0xf]
    %v295 = vld [vmem:[#allocation2 + $0x164] sm:$0xf]
    %v296 = vld [vmem:[#allocation2 + $0x168] sm:$0xf]
    %v297 = vld [vmem:[#allocation2 + $0x16c] sm:$0xf]
    %v298 = vld [vmem:[#allocation2 + $0x170] sm:$0xf]
    %v299 = vld [vmem:[#allocation2 + $0x174] sm:$0xf]
    %v300 = vld [vmem:[#allocation2 + $0x178] sm:$0xf]
    %v301 = vld [vmem:[#allocation2 + $0x17c] sm:$0xf]
    %v302 = vld [vmem:[#allocation11] sm:$0xf]
    %v303 = vld [vmem:[#allocation11 + $0x4] sm:$0xf]
    %v304 = vld [vmem:[#allocation11 + $0x8] sm:$0xf]
    %v305 = vld [vmem:[#allocation11 + $0xc] sm:$0xf]
    %v306 = vld [vmem:[#allocation11 + $0x10] sm:$0xf]
    %v307 = vld [vmem:[#allocation11 + $0x14] sm:$0xf]
    %v308 = vld [vmem:[#allocation11 + $0x18] sm:$0xf]
    %v309 = vld [vmem:[#allocation11 + $0x1c] sm:$0xf]
    %v310 = vld [vmem:[#allocation11 + $0x20] sm:$0xf]
    %v311 = vld [vmem:[#allocation11 + $0x24] sm:$0xf]
    %v312 = vld [vmem:[#allocation11 + $0x28] sm:$0xf]
    %v313 = vld [vmem:[#allocation11 + $0x2c] sm:$0xf]
    %v314 = vld [vmem:[#allocation11 + $0x30] sm:$0xf]
    %v315 = vld [vmem:[#allocation11 + $0x34] sm:$0xf]
    %v316 = vld [vmem:[#allocation11 + $0x38] sm:$0xf]
    %v317 = vld [vmem:[#allocation11 + $0x3c] sm:$0xf]
    %v318 = vld [vmem:[#allocation13] sm:$0x1]
    %v320 = vlaneseq
    %v321 = vshrl.u32 %v320, 7
    %v322 = vsub.s32 0, %v321
    %v323 = vrot.slane %v318, %v322
    %v421 = vunpack.c.l.b16 %v206
    %v422 = vunpack.c.l.b16 %v207
    %v423 = vunpack.c.l.b16 %v208
    %v424 = vunpack.c.l.b16 %v209
    %v425 = vunpack.c.l.b16 %v210
    %v426 = vunpack.c.l.b16 %v211
    %v427 = vunpack.c.l.b16 %v212
    %v428 = vunpack.c.l.b16 %v213
    %v429 = vunpack.c.l.b16 %v214
    %v430 = vunpack.c.l.b16 %v215
    %v431 = vunpack.c.l.b16 %v216
    %v432 = vunpack.c.l.b16 %v217
    %v433 = vunpack.c.l.b16 %v218
    %v434 = vunpack.c.l.b16 %v219
    %v435 = vunpack.c.l.b16 %v220
    %v436 = vunpack.c.l.b16 %v221
    %v437 = vunpack.c.l.b16 %v222
    %v438 = vunpack.c.l.b16 %v223
    %v439 = vunpack.c.l.b16 %v224
    %v440 = vunpack.c.l.b16 %v225
    %v441 = vunpack.c.l.b16 %v226
    %v442 = vunpack.c.l.b16 %v227
    %v443 = vunpack.c.l.b16 %v228
    %v444 = vunpack.c.l.b16 %v229
    %v445 = vunpack.c.l.b16 %v230
    %v446 = vunpack.c.l.b16 %v231
    %v447 = vunpack.c.l.b16 %v232
    %v448 = vunpack.c.l.b16 %v233
    %v449 = vunpack.c.l.b16 %v234
    %v450 = vunpack.c.l.b16 %v235
    %v451 = vunpack.c.l.b16 %v236
    %v452 = vunpack.c.l.b16 %v237
    %v453 = vunpack.c.l.b16 %v238
    %v454 = vunpack.c.l.b16 %v239
    %v455 = vunpack.c.l.b16 %v240
    %v456 = vunpack.c.l.b16 %v241
    %v457 = vunpack.c.l.b16 %v242
    %v458 = vunpack.c.l.b16 %v243
    %v459 = vunpack.c.l.b16 %v244
    %v460 = vunpack.c.l.b16 %v245
    %v461 = vunpack.c.l.b16 %v246
    %v462 = vunpack.c.l.b16 %v247
    %v463 = vunpack.c.l.b16 %v248
    %v464 = vunpack.c.l.b16 %v249
    %v465 = vunpack.c.l.b16 %v250
    %v466 = vunpack.c.l.b16 %v251
    %v467 = vunpack.c.l.b16 %v252
    %v468 = vunpack.c.l.b16 %v253
    %v469 = vunpack.c.l.b16 %v254
    %v470 = vunpack.c.l.b16 %v255
    %v471 = vunpack.c.l.b16 %v256
    %v472 = vunpack.c.l.b16 %v257
    %v473 = vunpack.c.l.b16 %v258
    %v474 = vunpack.c.l.b16 %v259
    %v475 = vunpack.c.l.b16 %v260
    %v476 = vunpack.c.l.b16 %v261
    %v477 = vunpack.c.l.b16 %v262
    %v478 = vunpack.c.l.b16 %v263
    %v479 = vunpack.c.l.b16 %v264
    %v480 = vunpack.c.l.b16 %v265
    %v481 = vunpack.c.l.b16 %v266
    %v482 = vunpack.c.l.b16 %v267
    %v483 = vunpack.c.l.b16 %v268
    %v484 = vunpack.c.l.b16 %v269
    %v485 = vunpack.c.l.b16 %v270
    %v486 = vunpack.c.l.b16 %v271
    %v487 = vunpack.c.l.b16 %v272
    %v488 = vunpack.c.l.b16 %v273
    %v489 = vunpack.c.l.b16 %v274
    %v490 = vunpack.c.l.b16 %v275
    %v491 = vunpack.c.l.b16 %v276
    %v492 = vunpack.c.l.b16 %v277
    %v493 = vunpack.c.l.b16 %v278
    %v494 = vunpack.c.l.b16 %v279
    %v495 = vunpack.c.l.b16 %v280
    %v496 = vunpack.c.l.b16 %v281
    %v497 = vunpack.c.l.b16 %v282
    %v498 = vunpack.c.l.b16 %v283
    %v499 = vunpack.c.l.b16 %v284
    %v500 = vunpack.c.l.b16 %v285
    %v501 = vunpack.c.l.b16 %v286
    %v502 = vunpack.c.l.b16 %v287
    %v503 = vunpack.c.l.b16 %v288
    %v504 = vunpack.c.l.b16 %v289
    %v505 = vunpack.c.l.b16 %v290
    %v506 = vunpack.c.l.b16 %v291
    %v507 = vunpack.c.l.b16 %v292
    %v508 = vunpack.c.l.b16 %v293
    %v509 = vunpack.c.l.b16 %v294
    %v510 = vunpack.c.l.b16 %v295
    %v511 = vunpack.c.l.b16 %v296
    %v512 = vunpack.c.l.b16 %v297
    %v513 = vunpack.c.l.b16 %v298
    %v514 = vunpack.c.l.b16 %v299
    %v515 = vunpack.c.l.b16 %v300
    %v516 = vunpack.c.l.b16 %v301
    %v517 = vpack.c.b16 %v422, %v421
    %v518 = vpack.c.b16 %v424, %v423
    %v519 = vpack.c.b16 %v426, %v425
    %v520 = vpack.c.b16 %v428, %v427
    %v521 = vpack.c.b16 %v430, %v429
    %v522 = vpack.c.b16 %v432, %v431
    %v523 = vpack.c.b16 %v434, %v433
    %v524 = vpack.c.b16 %v436, %v435
    %v525 = vpack.c.b16 %v438, %v437
    %v526 = vpack.c.b16 %v440, %v439
    %v527 = vpack.c.b16 %v442, %v441
    %v528 = vpack.c.b16 %v444, %v443
    %v529 = vpack.c.b16 %v446, %v445
    %v530 = vpack.c.b16 %v448, %v447
    %v531 = vpack.c.b16 %v450, %v449
    %v532 = vpack.c.b16 %v452, %v451
    %v533 = vpack.c.b16 %v454, %v453
    %v534 = vpack.c.b16 %v456, %v455
    %v535 = vpack.c.b16 %v458, %v457
    %v536 = vpack.c.b16 %v460, %v459
    %v537 = vpack.c.b16 %v462, %v461
    %v538 = vpack.c.b16 %v464, %v463
    %v539 = vpack.c.b16 %v466, %v465
    %v540 = vpack.c.b16 %v468, %v467
    %v541 = vpack.c.b16 %v470, %v469
    %v542 = vpack.c.b16 %v472, %v471
    %v543 = vpack.c.b16 %v474, %v473
    %v544 = vpack.c.b16 %v476, %v475
    %v545 = vpack.c.b16 %v478, %v477
    %v546 = vpack.c.b16 %v480, %v479
    %v547 = vpack.c.b16 %v482, %v481
    %v548 = vpack.c.b16 %v484, %v483
    %v549 = vpack.c.b16 %v486, %v485
    %v550 = vpack.c.b16 %v488, %v487
    %v551 = vpack.c.b16 %v490, %v489
    %v552 = vpack.c.b16 %v492, %v491
    %v553 = vpack.c.b16 %v494, %v493
    %v554 = vpack.c.b16 %v496, %v495
    %v555 = vpack.c.b16 %v498, %v497
    %v556 = vpack.c.b16 %v500, %v499
    %v557 = vpack.c.b16 %v502, %v501
    %v558 = vpack.c.b16 %v504, %v503
    %v559 = vpack.c.b16 %v506, %v505
    %v560 = vpack.c.b16 %v508, %v507
    %v561 = vpack.c.b16 %v510, %v509
    %v562 = vpack.c.b16 %v512, %v511
    %v563 = vpack.c.b16 %v514, %v513
    %v564 = vpack.c.b16 %v516, %v515
    %v629 = vunpack.c.l.b16 %v302
    %v630 = vunpack.c.l.b16 %v303
    %v631 = vunpack.c.l.b16 %v304
    %v632 = vunpack.c.l.b16 %v305
    %v633 = vunpack.c.l.b16 %v306
    %v634 = vunpack.c.l.b16 %v307
    %v635 = vunpack.c.l.b16 %v308
    %v636 = vunpack.c.l.b16 %v309
    %v637 = vunpack.c.l.b16 %v310
    %v638 = vunpack.c.l.b16 %v311
    %v639 = vunpack.c.l.b16 %v312
    %v640 = vunpack.c.l.b16 %v313
    %v641 = vunpack.c.l.b16 %v314
    %v642 = vunpack.c.l.b16 %v315
    %v643 = vunpack.c.l.b16 %v316
    %v644 = vunpack.c.l.b16 %v317
    %v645 = vpack.c.b16 %v630, %v629
    %v646 = vpack.c.b16 %v632, %v631
    %v647 = vpack.c.b16 %v634, %v633
    %v648 = vpack.c.b16 %v636, %v635
    %v649 = vpack.c.b16 %v638, %v637
    %v650 = vpack.c.b16 %v640, %v639
    %v651 = vpack.c.b16 %v642, %v641
    %v652 = vpack.c.b16 %v644, %v643
    %661 = vmatprep.subr.bf16.mxu0 0
    %662 = vmatpush1.bf16.msra.mxu0 %v645
    %663 = vmatprep.subr.bf16.mxu0 0
    %664 = vmatpush1.bf16.msra.mxu0 %v646
    %665 = vmatprep.subr.bf16.mxu0 0
    %666 = vmatpush1.bf16.msra.mxu0 %v647
    %667 = vmatprep.subr.bf16.mxu0 0
    %668 = vmatpush1.bf16.msra.mxu0 %v648
    %669 = vmatprep.subr.bf16.mxu0 0
    %670 = vmatpush1.bf16.msra.mxu0 %v649
    %671 = vmatprep.subr.bf16.mxu0 0
    %672 = vmatpush1.bf16.msra.mxu0 %v650
    %673 = vmatprep.subr.bf16.mxu0 0
    %674 = vmatpush1.bf16.msra.mxu0 %v651
    %675 = vmatprep.subr.bf16.mxu0 0
    %676 = vmatpush1.bf16.msra.mxu0 %v652
    %677 = vmatprep.subr.bf16.mxu0 0
    %678 = vmatpush1.bf16.msra.mxu0 0
    %679 = vmatprep.subr.bf16.mxu0 0
    %680 = vmatpush1.bf16.msra.mxu0 0
    %681 = vmatprep.subr.bf16.mxu0 0
    %682 = vmatpush1.bf16.msra.mxu0 0
    %683 = vmatprep.subr.bf16.mxu0 0
    %684 = vmatpush1.bf16.msra.mxu0 0
    %685 = vmatprep.subr.bf16.mxu0 0
    %686 = vmatpush1.bf16.msra.mxu0 0
    %687 = vmatprep.subr.bf16.mxu0 0
    %688 = vmatpush1.bf16.msra.mxu0 0
    %689 = vmatprep.subr.bf16.mxu0 0
    %690 = vmatpush1.bf16.msra.mxu0 0
    %691 = vmatprep.subr.bf16.mxu0 0
    %692 = vmatpush1.bf16.msra.mxu0 0
    %693 = vmatprep.mubr.bf16.mxu0 0
    %694 = vmatmul.mubr.bf16.gmra.mrb[0].mxu0 %v517
    %v695 = vpop.f32.mrb[0].mxu0
    %v696 = vadd.f32 %v323, %v695
    %v697 = vpop.f32.mrb[0].mxu0
    %v698 = vpop.f32.mrb[0].mxu0
    %v699 = vadd.f32 %v323, %v698
    %v700 = vpop.f32.mrb[0].mxu0
    %701 = vmatprep.mubr.bf16.mxu0 0
    %702 = vmatmul.mubr.bf16.gmra.mrb[0].mxu0 %v518
    %v703 = vpop.f32.mrb[0].mxu0
    %v704 = vadd.f32 %v323, %v703
    %v705 = vpop.f32.mrb[0].mxu0
    %v706 = vpop.f32.mrb[0].mxu0
    %v707 = vadd.f32 %v323, %v706
    %v708 = vpop.f32.mrb[0].mxu0
    %709 = vmatprep.mubr.bf16.mxu0 0
    %710 = vmatmul.mubr.bf16.gmra.mrb[0].mxu0 %v519
    %v711 = vpop.f32.mrb[0].mxu0
    %v712 = vadd.f32 %v323, %v711
    %v713 = vpop.f32.mrb[0].mxu0
    %v714 = vpop.f32.mrb[0].mxu0
    %v715 = vadd.f32 %v323, %v714
    %v716 = vpop.f32.mrb[0].mxu0
    %717 = vmatprep.mubr.bf16.mxu0 0
    %718 = vmatmul.mubr.bf16.gmra.mrb[0].mxu0 %v520
    %v719 = vpop.f32.mrb[0].mxu0
    %v720 = vadd.f32 %v323, %v719
    %v721 = vpop.f32.mrb[0].mxu0
    %v722 = vpop.f32.mrb[0].mxu0
    %v723 = vadd.f32 %v323, %v722
    %v724 = vpop.f32.mrb[0].mxu0
    %725 = vmatprep.mubr.bf16.mxu0 0
    %726 = vmatmul.mubr.bf16.gmra.mrb[0].mxu0 %v521
    %v727 = vpop.f32.mrb[0].mxu0
    %v728 = vadd.f32 %v323, %v727
    %v729 = vpop.f32.mrb[0].mxu0
    %v730 = vpop.f32.mrb[0].mxu0
    %v731 = vadd.f32 %v323, %v730
    %v732 = vpop.f32.mrb[0].mxu0
    %733 = vmatprep.mubr.bf16.mxu0 0
    %734 = vmatmul.mubr.bf16.gmra.mrb[0].mxu0 %v522
    %v735 = vpop.f32.mrb[0].mxu0
    %v736 = vadd.f32 %v323, %v735
    %v737 = vpop.f32.mrb[0].mxu0
    %v738 = vpop.f32.mrb[0].mxu0
    %v739 = vadd.f32 %v323, %v738
    %v740 = vpop.f32.mrb[0].mxu0
    %741 = vmatprep.mubr.bf16.mxu0 0
    %742 = vmatmul.mubr.bf16.gmra.mrb[0].mxu0 %v523
    %v743 = vpop.f32.mrb[0].mxu0
    %v744 = vadd.f32 %v323, %v743
    %v745 = vpop.f32.mrb[0].mxu0
    %v746 = vpop.f32.mrb[0].mxu0
    %v747 = vadd.f32 %v323, %v746
    %v748 = vpop.f32.mrb[0].mxu0
    %749 = vmatprep.mubr.bf16.mxu0 0
    %750 = vmatmul.mubr.bf16.gmra.mrb[0].mxu0 %v524
    %v751 = vpop.f32.mrb[0].mxu0
    %v752 = vadd.f32 %v323, %v751
    %v753 = vpop.f32.mrb[0].mxu0
    %v754 = vpop.f32.mrb[0].mxu0
    %v755 = vadd.f32 %v323, %v754
    %v756 = vpop.f32.mrb[0].mxu0
    %757 = vmatprep.mubr.bf16.mxu0 0
    %758 = vmatmul.mubr.bf16.gmra.mrb[0].mxu0 %v525
    %v759 = vpop.f32.mrb[0].mxu0
    %v760 = vadd.f32 %v323, %v759
    %v761 = vpop.f32.mrb[0].mxu0
    %v762 = vpop.f32.mrb[0].mxu0
    %v763 = vadd.f32 %v323, %v762
    %v764 = vpop.f32.mrb[0].mxu0
    %765 = vmatprep.mubr.bf16.mxu0 0
    %766 = vmatmul.mubr.bf16.gmra.mrb[0].mxu0 %v526
    %v767 = vpop.f32.mrb[0].mxu0
    %v768 = vadd.f32 %v323, %v767
    %v769 = vpop.f32.mrb[0].mxu0
    %v770 = vpop.f32.mrb[0].mxu0
    %v771 = vadd.f32 %v323, %v770
    %v772 = vpop.f32.mrb[0].mxu0
    %773 = vmatprep.mubr.bf16.mxu0 0
    %774 = vmatmul.mubr.bf16.gmra.mrb[0].mxu0 %v527
    %v775 = vpop.f32.mrb[0].mxu0
    %v776 = vadd.f32 %v323, %v775
    %v777 = vpop.f32.mrb[0].mxu0
    %v778 = vpop.f32.mrb[0].mxu0
    %v779 = vadd.f32 %v323, %v778
    %v780 = vpop.f32.mrb[0].mxu0
    %781 = vmatprep.mubr.bf16.mxu0 0
    %782 = vmatmul.mubr.bf16.gmra.mrb[0].mxu0 %v528
    %v783 = vpop.f32.mrb[0].mxu0
    %v784 = vadd.f32 %v323, %v783
    %v785 = vpop.f32.mrb[0].mxu0
    %v786 = vpop.f32.mrb[0].mxu0
    %v787 = vadd.f32 %v323, %v786
    %v788 = vpop.f32.mrb[0].mxu0
    %789 = vmatprep.mubr.bf16.mxu0 0
    %790 = vmatmul.mubr.bf16.gmra.mrb[0].mxu0 %v529
    %v791 = vpop.f32.mrb[0].mxu0
    %v792 = vadd.f32 %v323, %v791
    %v793 = vpop.f32.mrb[0].mxu0
    %v794 = vpop.f32.mrb[0].mxu0
    %v795 = vadd.f32 %v323, %v794
    %v796 = vpop.f32.mrb[0].mxu0
    %797 = vmatprep.mubr.bf16.mxu0 0
    %798 = vmatmul.mubr.bf16.gmra.mrb[0].mxu0 %v530
    %v799 = vpop.f32.mrb[0].mxu0
    %v800 = vadd.f32 %v323, %v799
    %v801 = vpop.f32.mrb[0].mxu0
    %v802 = vpop.f32.mrb[0].mxu0
    %v803 = vadd.f32 %v323, %v802
    %v804 = vpop.f32.mrb[0].mxu0
    %805 = vmatprep.mubr.bf16.mxu0 0
    %806 = vmatmul.mubr.bf16.gmra.mrb[0].mxu0 %v531
    %v807 = vpop.f32.mrb[0].mxu0
    %v808 = vadd.f32 %v323, %v807
    %v809 = vpop.f32.mrb[0].mxu0
    %v810 = vpop.f32.mrb[0].mxu0
    %v811 = vadd.f32 %v323, %v810
    %v812 = vpop.f32.mrb[0].mxu0
    %813 = vmatprep.mubr.bf16.mxu0 0
    %814 = vmatmul.mubr.bf16.gmra.mrb[0].mxu0 %v532
    %v815 = vpop.f32.mrb[0].mxu0
    %v816 = vadd.f32 %v323, %v815
    %v817 = vpop.f32.mrb[0].mxu0
    %v818 = vpop.f32.mrb[0].mxu0
    %v819 = vadd.f32 %v323, %v818
    %v820 = vpop.f32.mrb[0].mxu0
    %821 = vmatprep.mubr.bf16.mxu0 0
    %822 = vmatmul.mubr.bf16.gmra.mrb[0].mxu0 %v533
    %v823 = vpop.f32.mrb[0].mxu0
    %v824 = vadd.f32 %v323, %v823
    %v825 = vpop.f32.mrb[0].mxu0
    %v826 = vpop.f32.mrb[0].mxu0
    %v827 = vadd.f32 %v323, %v826
    %v828 = vpop.f32.mrb[0].mxu0
    %829 = vmatprep.mubr.bf16.mxu0 0
    %830 = vmatmul.mubr.bf16.gmra.mrb[0].mxu0 %v534
    %v831 = vpop.f32.mrb[0].mxu0
    %v832 = vadd.f32 %v323, %v831
    %v833 = vpop.f32.mrb[0].mxu0
    %v834 = vpop.f32.mrb[0].mxu0
    %v835 = vadd.f32 %v323, %v834
    %v836 = vpop.f32.mrb[0].mxu0
    %837 = vmatprep.mubr.bf16.mxu0 0
    %838 = vmatmul.mubr.bf16.gmra.mrb[0].mxu0 %v535
    %v839 = vpop.f32.mrb[0].mxu0
    %v840 = vadd.f32 %v323, %v839
    %v841 = vpop.f32.mrb[0].mxu0
    %v842 = vpop.f32.mrb[0].mxu0
    %v843 = vadd.f32 %v323, %v842
    %v844 = vpop.f32.mrb[0].mxu0
    %845 = vmatprep.mubr.bf16.mxu0 0
    %846 = vmatmul.mubr.bf16.gmra.mrb[0].mxu0 %v536
    %v847 = vpop.f32.mrb[0].mxu0
    %v848 = vadd.f32 %v323, %v847
    %v849 = vpop.f32.mrb[0].mxu0
    %v850 = vpop.f32.mrb[0].mxu0
    %v851 = vadd.f32 %v323, %v850
    %v852 = vpop.f32.mrb[0].mxu0
    %853 = vmatprep.mubr.bf16.mxu0 0
    %854 = vmatmul.mubr.bf16.gmra.mrb[0].mxu0 %v537
    %v855 = vpop.f32.mrb[0].mxu0
    %v856 = vadd.f32 %v323, %v855
    %v857 = vpop.f32.mrb[0].mxu0
    %v858 = vpop.f32.mrb[0].mxu0
    %v859 = vadd.f32 %v323, %v858
    %v860 = vpop.f32.mrb[0].mxu0
    %861 = vmatprep.mubr.bf16.mxu0 0
    %862 = vmatmul.mubr.bf16.gmra.mrb[0].mxu0 %v538
    %v863 = vpop.f32.mrb[0].mxu0
    %v864 = vadd.f32 %v323, %v863
    %v865 = vpop.f32.mrb[0].mxu0
    %v866 = vpop.f32.mrb[0].mxu0
    %v867 = vadd.f32 %v323, %v866
    %v868 = vpop.f32.mrb[0].mxu0
    %869 = vmatprep.mubr.bf16.mxu0 0
    %870 = vmatmul.mubr.bf16.gmra.mrb[0].mxu0 %v539
    %v871 = vpop.f32.mrb[0].mxu0
    %v872 = vadd.f32 %v323, %v871
    %v873 = vpop.f32.mrb[0].mxu0
    %v874 = vpop.f32.mrb[0].mxu0
    %v875 = vadd.f32 %v323, %v874
    %v876 = vpop.f32.mrb[0].mxu0
    %877 = vmatprep.mubr.bf16.mxu0 0
    %878 = vmatmul.mubr.bf16.gmra.mrb[0].mxu0 %v540
    %v879 = vpop.f32.mrb[0].mxu0
    %v880 = vadd.f32 %v323, %v879
    %v881 = vpop.f32.mrb[0].mxu0
    %v882 = vpop.f32.mrb[0].mxu0
    %v883 = vadd.f32 %v323, %v882
    %v884 = vpop.f32.mrb[0].mxu0
    %885 = vmatprep.mubr.bf16.mxu0 0
    %886 = vmatmul.mubr.bf16.gmra.mrb[0].mxu0 %v541
    %v887 = vpop.f32.mrb[0].mxu0
    %v888 = vadd.f32 %v323, %v887
    %v889 = vpop.f32.mrb[0].mxu0
    %v890 = vpop.f32.mrb[0].mxu0
    %v891 = vadd.f32 %v323, %v890
    %v892 = vpop.f32.mrb[0].mxu0
    %893 = vmatprep.mubr.bf16.mxu0 0
    %894 = vmatmul.mubr.bf16.gmra.mrb[0].mxu0 %v542
    %v895 = vpop.f32.mrb[0].mxu0
    %v896 = vadd.f32 %v323, %v895
    %v897 = vpop.f32.mrb[0].mxu0
    %v898 = vpop.f32.mrb[0].mxu0
    %v899 = vadd.f32 %v323, %v898
    %v900 = vpop.f32.mrb[0].mxu0
    %901 = vmatprep.mubr.bf16.mxu0 0
    %902 = vmatmul.mubr.bf16.gmra.mrb[0].mxu0 %v543
    %v903 = vpop.f32.mrb[0].mxu0
    %v904 = vadd.f32 %v323, %v903
    %v905 = vpop.f32.mrb[0].mxu0
    %v906 = vpop.f32.mrb[0].mxu0
    %v907 = vadd.f32 %v323, %v906
    %v908 = vpop.f32.mrb[0].mxu0
    %909 = vmatprep.mubr.bf16.mxu0 0
    %910 = vmatmul.mubr.bf16.gmra.mrb[0].mxu0 %v544
    %v911 = vpop.f32.mrb[0].mxu0
    %v912 = vadd.f32 %v323, %v911
    %v913 = vpop.f32.mrb[0].mxu0
    %v914 = vpop.f32.mrb[0].mxu0
    %v915 = vadd.f32 %v323, %v914
    %v916 = vpop.f32.mrb[0].mxu0
    %917 = vmatprep.mubr.bf16.mxu0 0
    %918 = vmatmul.mubr.bf16.gmra.mrb[0].mxu0 %v545
    %v919 = vpop.f32.mrb[0].mxu0
    %v920 = vadd.f32 %v323, %v919
    %v921 = vpop.f32.mrb[0].mxu0
    %v922 = vpop.f32.mrb[0].mxu0
    %v923 = vadd.f32 %v323, %v922
    %v924 = vpop.f32.mrb[0].mxu0
    %925 = vmatprep.mubr.bf16.mxu0 0
    %926 = vmatmul.mubr.bf16.gmra.mrb[0].mxu0 %v546
    %v927 = vpop.f32.mrb[0].mxu0
    %v928 = vadd.f32 %v323, %v927
    %v929 = vpop.f32.mrb[0].mxu0
    %v930 = vpop.f32.mrb[0].mxu0
    %v931 = vadd.f32 %v323, %v930
    %v932 = vpop.f32.mrb[0].mxu0
    %933 = vmatprep.mubr.bf16.mxu0 0
    %934 = vmatmul.mubr.bf16.gmra.mrb[0].mxu0 %v547
    %v935 = vpop.f32.mrb[0].mxu0
    %v936 = vadd.f32 %v323, %v935
    %v937 = vpop.f32.mrb[0].mxu0
    %v938 = vpop.f32.mrb[0].mxu0
    %v939 = vadd.f32 %v323, %v938
    %v940 = vpop.f32.mrb[0].mxu0
    %941 = vmatprep.mubr.bf16.mxu0 0
    %942 = vmatmul.mubr.bf16.gmra.mrb[0].mxu0 %v548
    %v943 = vpop.f32.mrb[0].mxu0
    %v944 = vadd.f32 %v323, %v943
    %v945 = vpop.f32.mrb[0].mxu0
    %v946 = vpop.f32.mrb[0].mxu0
    %v947 = vadd.f32 %v323, %v946
    %v948 = vpop.f32.mrb[0].mxu0
    %949 = vmatprep.mubr.bf16.mxu0 0
    %950 = vmatmul.mubr.bf16.gmra.mrb[0].mxu0 %v549
    %v951 = vpop.f32.mrb[0].mxu0
    %v952 = vadd.f32 %v323, %v951
    %v953 = vpop.f32.mrb[0].mxu0
    %v954 = vpop.f32.mrb[0].mxu0
    %v955 = vadd.f32 %v323, %v954
    %v956 = vpop.f32.mrb[0].mxu0
    %957 = vmatprep.mubr.bf16.mxu0 0
    %958 = vmatmul.mubr.bf16.gmra.mrb[0].mxu0 %v550
    %v959 = vpop.f32.mrb[0].mxu0
    %v960 = vadd.f32 %v323, %v959
    %v961 = vpop.f32.mrb[0].mxu0
    %v962 = vpop.f32.mrb[0].mxu0
    %v963 = vadd.f32 %v323, %v962
    %v964 = vpop.f32.mrb[0].mxu0
    %965 = vmatprep.mubr.bf16.mxu0 0
    %966 = vmatmul.mubr.bf16.gmra.mrb[0].mxu0 %v551
    %v967 = vpop.f32.mrb[0].mxu0
    %v968 = vadd.f32 %v323, %v967
    %v969 = vpop.f32.mrb[0].mxu0
    %v970 = vpop.f32.mrb[0].mxu0
    %v971 = vadd.f32 %v323, %v970
    %v972 = vpop.f32.mrb[0].mxu0
    %973 = vmatprep.mubr.bf16.mxu0 0
    %974 = vmatmul.mubr.bf16.gmra.mrb[0].mxu0 %v552
    %v975 = vpop.f32.mrb[0].mxu0
    %v976 = vadd.f32 %v323, %v975
    %v977 = vpop.f32.mrb[0].mxu0
    %v978 = vpop.f32.mrb[0].mxu0
    %v979 = vadd.f32 %v323, %v978
    %v980 = vpop.f32.mrb[0].mxu0
    %981 = vmatprep.mubr.bf16.mxu0 0
    %982 = vmatmul.mubr.bf16.gmra.mrb[0].mxu0 %v553
    %v983 = vpop.f32.mrb[0].mxu0
    %v984 = vadd.f32 %v323, %v983
    %v985 = vpop.f32.mrb[0].mxu0
    %v986 = vpop.f32.mrb[0].mxu0
    %v987 = vadd.f32 %v323, %v986
    %v988 = vpop.f32.mrb[0].mxu0
    %989 = vmatprep.mubr.bf16.mxu0 0
    %990 = vmatmul.mubr.bf16.gmra.mrb[0].mxu0 %v554
    %v991 = vpop.f32.mrb[0].mxu0
    %v992 = vadd.f32 %v323, %v991
    %v993 = vpop.f32.mrb[0].mxu0
    %v994 = vpop.f32.mrb[0].mxu0
    %v995 = vadd.f32 %v323, %v994
    %v996 = vpop.f32.mrb[0].mxu0
    %997 = vmatprep.mubr.bf16.mxu0 0
    %998 = vmatmul.mubr.bf16.gmra.mrb[0].mxu0 %v555
    %v999 = vpop.f32.mrb[0].mxu0
    %v1000 = vadd.f32 %v323, %v999
    %v1001 = vpop.f32.mrb[0].mxu0
    %v1002 = vpop.f32.mrb[0].mxu0
    %v1003 = vadd.f32 %v323, %v1002
    %v1004 = vpop.f32.mrb[0].mxu0
    %1005 = vmatprep.mubr.bf16.mxu0 0
    %1006 = vmatmul.mubr.bf16.gmra.mrb[0].mxu0 %v556
    %v1007 = vpop.f32.mrb[0].mxu0
    %v1008 = vadd.f32 %v323, %v1007
    %v1009 = vpop.f32.mrb[0].mxu0
    %v1010 = vpop.f32.mrb[0].mxu0
    %v1011 = vadd.f32 %v323, %v1010
    %v1012 = vpop.f32.mrb[0].mxu0
    %1013 = vmatprep.mubr.bf16.mxu0 0
    %1014 = vmatmul.mubr.bf16.gmra.mrb[0].mxu0 %v557
    %v1015 = vpop.f32.mrb[0].mxu0
    %v1016 = vadd.f32 %v323, %v1015
    %v1017 = vpop.f32.mrb[0].mxu0
    %v1018 = vpop.f32.mrb[0].mxu0
    %v1019 = vadd.f32 %v323, %v1018
    %v1020 = vpop.f32.mrb[0].mxu0
    %1021 = vmatprep.mubr.bf16.mxu0 0
    %1022 = vmatmul.mubr.bf16.gmra.mrb[0].mxu0 %v558
    %v1023 = vpop.f32.mrb[0].mxu0
    %v1024 = vadd.f32 %v323, %v1023
    %v1025 = vpop.f32.mrb[0].mxu0
    %v1026 = vpop.f32.mrb[0].mxu0
    %v1027 = vadd.f32 %v323, %v1026
    %v1028 = vpop.f32.mrb[0].mxu0
    %1029 = vmatprep.mubr.bf16.mxu0 0
    %1030 = vmatmul.mubr.bf16.gmra.mrb[0].mxu0 %v559
    %v1031 = vpop.f32.mrb[0].mxu0
    %v1032 = vadd.f32 %v323, %v1031
    %v1033 = vpop.f32.mrb[0].mxu0
    %v1034 = vpop.f32.mrb[0].mxu0
    %v1035 = vadd.f32 %v323, %v1034
    %v1036 = vpop.f32.mrb[0].mxu0
    %1037 = vmatprep.mubr.bf16.mxu0 0
    %1038 = vmatmul.mubr.bf16.gmra.mrb[0].mxu0 %v560
    %v1039 = vpop.f32.mrb[0].mxu0
    %v1040 = vadd.f32 %v323, %v1039
    %v1041 = vpop.f32.mrb[0].mxu0
    %v1042 = vpop.f32.mrb[0].mxu0
    %v1043 = vadd.f32 %v323, %v1042
    %v1044 = vpop.f32.mrb[0].mxu0
    %1045 = vmatprep.mubr.bf16.mxu0 0
    %1046 = vmatmul.mubr.bf16.gmra.mrb[0].mxu0 %v561
    %v1047 = vpop.f32.mrb[0].mxu0
    %v1048 = vadd.f32 %v323, %v1047
    %v1049 = vpop.f32.mrb[0].mxu0
    %v1050 = vpop.f32.mrb[0].mxu0
    %v1051 = vadd.f32 %v323, %v1050
    %v1052 = vpop.f32.mrb[0].mxu0
    %1053 = vmatprep.mubr.bf16.mxu0 0
    %1054 = vmatmul.mubr.bf16.gmra.mrb[0].mxu0 %v562
    %v1055 = vpop.f32.mrb[0].mxu0
    %v1056 = vadd.f32 %v323, %v1055
    %v1057 = vpop.f32.mrb[0].mxu0
    %v1058 = vpop.f32.mrb[0].mxu0
    %v1059 = vadd.f32 %v323, %v1058
    %v1060 = vpop.f32.mrb[0].mxu0
    %1061 = vmatprep.mubr.bf16.mxu0 0
    %1062 = vmatmul.mubr.bf16.gmra.mrb[0].mxu0 %v563
    %v1063 = vpop.f32.mrb[0].mxu0
    %v1064 = vadd.f32 %v323, %v1063
    %v1065 = vpop.f32.mrb[0].mxu0
    %v1066 = vpop.f32.mrb[0].mxu0
    %v1067 = vadd.f32 %v323, %v1066
    %v1068 = vpop.f32.mrb[0].mxu0
    %1069 = vmatprep.mubr.bf16.mxu0 0
    %1070 = vmatmul.mubr.bf16.gmra.mrb[0].mxu0 %v564
    %v1071 = vpop.f32.mrb[0].mxu0
    %v1072 = vadd.f32 %v323, %v1071
    %v1073 = vpop.f32.mrb[0].mxu0
    %v1074 = vpop.f32.mrb[0].mxu0
    %v1075 = vadd.f32 %v323, %v1074
    %v1076 = vpop.f32.mrb[0].mxu0
    %1077 = vdwg.mxu0
    %v1078 = vmax.f32 %v696, 0.0
    %v1079 = vmax.f32 %v699, 0.0
    %v1080 = vmax.f32 %v704, 0.0
    %v1081 = vmax.f32 %v707, 0.0
    %v1082 = vmax.f32 %v712, 0.0
    %v1083 = vmax.f32 %v715, 0.0
    %v1084 = vmax.f32 %v720, 0.0
    %v1085 = vmax.f32 %v723, 0.0
    %v1086 = vmax.f32 %v728, 0.0
    %v1087 = vmax.f32 %v731, 0.0
    %v1088 = vmax.f32 %v736, 0.0
    %v1089 = vmax.f32 %v739, 0.0
    %v1090 = vmax.f32 %v744, 0.0
    %v1091 = vmax.f32 %v747, 0.0
    %v1092 = vmax.f32 %v752, 0.0
    %v1093 = vmax.f32 %v755, 0.0
    %v1094 = vmax.f32 %v760, 0.0
    %v1095 = vmax.f32 %v763, 0.0
    %v1096 = vmax.f32 %v768, 0.0
    %v1097 = vmax.f32 %v771, 0.0
    %v1098 = vmax.f32 %v776, 0.0
    %v1099 = vmax.f32 %v779, 0.0
    %v1100 = vmax.f32 %v784, 0.0
    %v1101 = vmax.f32 %v787, 0.0
    %v1102 = vmax.f32 %v792, 0.0
    %v1103 = vmax.f32 %v795, 0.0
    %v1104 = vmax.f32 %v800, 0.0
    %v1105 = vmax.f32 %v803, 0.0
    %v1106 = vmax.f32 %v808, 0.0
    %v1107 = vmax.f32 %v811, 0.0
    %v1108 = vmax.f32 %v816, 0.0
    %v1109 = vmax.f32 %v819, 0.0
    %v1110 = vmax.f32 %v824, 0.0
    %v1111 = vmax.f32 %v827, 0.0
    %v1112 = vmax.f32 %v832, 0.0
    %v1113 = vmax.f32 %v835, 0.0
    %v1114 = vmax.f32 %v840, 0.0
    %v1115 = vmax.f32 %v843, 0.0
    %v1116 = vmax.f32 %v848, 0.0
    %v1117 = vmax.f32 %v851, 0.0
    %v1118 = vmax.f32 %v856, 0.0
    %v1119 = vmax.f32 %v859, 0.0
    %v1120 = vmax.f32 %v864, 0.0
    %v1121 = vmax.f32 %v867, 0.0
    %v1122 = vmax.f32 %v872, 0.0
    %v1123 = vmax.f32 %v875, 0.0
    %v1124 = vmax.f32 %v880, 0.0
    %v1125 = vmax.f32 %v883, 0.0
    %v1126 = vmax.f32 %v888, 0.0
    %v1127 = vmax.f32 %v891, 0.0
    %v1128 = vmax.f32 %v896, 0.0
    %v1129 = vmax.f32 %v899, 0.0
    %v1130 = vmax.f32 %v904, 0.0
    %v1131 = vmax.f32 %v907, 0.0
    %v1132 = vmax.f32 %v912, 0.0
    %v1133 = vmax.f32 %v915, 0.0
    %v1134 = vmax.f32 %v920, 0.0
    %v1135 = vmax.f32 %v923, 0.0
    %v1136 = vmax.f32 %v928, 0.0
    %v1137 = vmax.f32 %v931, 0.0
    %v1138 = vmax.f32 %v936, 0.0
    %v1139 = vmax.f32 %v939, 0.0
    %v1140 = vmax.f32 %v944, 0.0
    %v1141 = vmax.f32 %v947, 0.0
    %v1142 = vmax.f32 %v952, 0.0
    %v1143 = vmax.f32 %v955, 0.0
    %v1144 = vmax.f32 %v960, 0.0
    %v1145 = vmax.f32 %v963, 0.0
    %v1146 = vmax.f32 %v968, 0.0
    %v1147 = vmax.f32 %v971, 0.0
    %v1148 = vmax.f32 %v976, 0.0
    %v1149 = vmax.f32 %v979, 0.0
    %v1150 = vmax.f32 %v984, 0.0
    %v1151 = vmax.f32 %v987, 0.0
    %v1152 = vmax.f32 %v992, 0.0
    %v1153 = vmax.f32 %v995, 0.0
    %v1154 = vmax.f32 %v1000, 0.0
    %v1155 = vmax.f32 %v1003, 0.0
    %v1156 = vmax.f32 %v1008, 0.0
    %v1157 = vmax.f32 %v1011, 0.0
    %v1158 = vmax.f32 %v1016, 0.0
    %v1159 = vmax.f32 %v1019, 0.0
    %v1160 = vmax.f32 %v1024, 0.0
    %v1161 = vmax.f32 %v1027, 0.0
    %v1162 = vmax.f32 %v1032, 0.0
    %v1163 = vmax.f32 %v1035, 0.0
    %v1164 = vmax.f32 %v1040, 0.0
    %v1165 = vmax.f32 %v1043, 0.0
    %v1166 = vmax.f32 %v1048, 0.0
    %v1167 = vmax.f32 %v1051, 0.0
    %v1168 = vmax.f32 %v1056, 0.0
    %v1169 = vmax.f32 %v1059, 0.0
    %v1170 = vmax.f32 %v1064, 0.0
    %v1171 = vmax.f32 %v1067, 0.0
    %v1172 = vmax.f32 %v1072, 0.0
    %v1173 = vmax.f32 %v1075, 0.0
    %v1174 = vpack.c.bf16 %v1079, %v1078
    %v1175 = vpack.c.bf16 %v1081, %v1080
    %v1176 = vpack.c.bf16 %v1083, %v1082
    %v1177 = vpack.c.bf16 %v1085, %v1084
    %v1178 = vpack.c.bf16 %v1087, %v1086
    %v1179 = vpack.c.bf16 %v1089, %v1088
    %v1180 = vpack.c.bf16 %v1091, %v1090
    %v1181 = vpack.c.bf16 %v1093, %v1092
    %v1182 = vpack.c.bf16 %v1095, %v1094
    %v1183 = vpack.c.bf16 %v1097, %v1096
    %v1184 = vpack.c.bf16 %v1099, %v1098
    %v1185 = vpack.c.bf16 %v1101, %v1100
    %v1186 = vpack.c.bf16 %v1103, %v1102
    %v1187 = vpack.c.bf16 %v1105, %v1104
    %v1188 = vpack.c.bf16 %v1107, %v1106
    %v1189 = vpack.c.bf16 %v1109, %v1108
    %v1190 = vpack.c.bf16 %v1111, %v1110
    %v1191 = vpack.c.bf16 %v1113, %v1112
    %v1192 = vpack.c.bf16 %v1115, %v1114
    %v1193 = vpack.c.bf16 %v1117, %v1116
    %v1194 = vpack.c.bf16 %v1119, %v1118
    %v1195 = vpack.c.bf16 %v1121, %v1120
    %v1196 = vpack.c.bf16 %v1123, %v1122
    %v1197 = vpack.c.bf16 %v1125, %v1124
    %v1198 = vpack.c.bf16 %v1127, %v1126
    %v1199 = vpack.c.bf16 %v1129, %v1128
    %v1200 = vpack.c.bf16 %v1131, %v1130
    %v1201 = vpack.c.bf16 %v1133, %v1132
    %v1202 = vpack.c.bf16 %v1135, %v1134
    %v1203 = vpack.c.bf16 %v1137, %v1136
    %v1204 = vpack.c.bf16 %v1139, %v1138
    %v1205 = vpack.c.bf16 %v1141, %v1140
    %v1206 = vpack.c.bf16 %v1143, %v1142
    %v1207 = vpack.c.bf16 %v1145, %v1144
    %v1208 = vpack.c.bf16 %v1147, %v1146
    %v1209 = vpack.c.bf16 %v1149, %v1148
    %v1210 = vpack.c.bf16 %v1151, %v1150
    %v1211 = vpack.c.bf16 %v1153, %v1152
    %v1212 = vpack.c.bf16 %v1155, %v1154
    %v1213 = vpack.c.bf16 %v1157, %v1156
    %v1214 = vpack.c.bf16 %v1159, %v1158
    %v1215 = vpack.c.bf16 %v1161, %v1160
    %v1216 = vpack.c.bf16 %v1163, %v1162
    %v1217 = vpack.c.bf16 %v1165, %v1164
    %v1218 = vpack.c.bf16 %v1167, %v1166
    %v1219 = vpack.c.bf16 %v1169, %v1168
    %v1220 = vpack.c.bf16 %v1171, %v1170
    %v1221 = vpack.c.bf16 %v1173, %v1172
    %v1222 = vld [vmem:[#allocation14] sm:$0xff]
    %v1223 = vld [vmem:[#allocation14 + $0x8] sm:$0xff]
    %v1224 = vld [vmem:[#allocation14 + $0x10] sm:$0xff]
    %v1225 = vld [vmem:[#allocation14 + $0x18] sm:$0xff]
    %v1226 = vld [vmem:[#allocation14 + $0x20] sm:$0xff]
    %v1227 = vld [vmem:[#allocation14 + $0x28] sm:$0xff]
    %v1228 = vld [vmem:[#allocation14 + $0x30] sm:$0xff]
    %v1229 = vld [vmem:[#allocation14 + $0x38] sm:$0xff]
    %v1230 = vld [vmem:[#allocation16] sm:$0x3]
    %v1232 = vlaneseq
    %v1233 = vshrl.u32 %v1232, 7
    %v1234 = vsub.s32 0, %v1233
    %v1235 = vrot.slane %v1230, %v1234
    %v1236 = vlaneseq
    %v1237 = vshrl.u32 %v1236, 7
    %v1238 = vsub.s32 1, %v1237
    %v1239 = vrot.slane %v1230, %v1238
    %v1250 = vunpack.c.l.b16 %v1222
    %v1251 = vunpack.c.h.b16 %v1222
    %v1252 = vunpack.c.l.b16 %v1223
    %v1253 = vunpack.c.h.b16 %v1223
    %v1254 = vunpack.c.l.b16 %v1224
    %v1255 = vunpack.c.h.b16 %v1224
    %v1256 = vunpack.c.l.b16 %v1225
    %v1257 = vunpack.c.h.b16 %v1225
    %v1258 = vunpack.c.l.b16 %v1226
    %v1259 = vunpack.c.h.b16 %v1226
    %v1260 = vunpack.c.l.b16 %v1227
    %v1261 = vunpack.c.h.b16 %v1227
    %v1262 = vunpack.c.l.b16 %v1228
    %v1263 = vunpack.c.h.b16 %v1228
    %v1264 = vunpack.c.l.b16 %v1229
    %v1265 = vunpack.c.h.b16 %v1229
    %v1266 = vpack.c.b16 %v1252, %v1250
    %v1267 = vpack.c.b16 %v1253, %v1251
    %v1268 = vpack.c.b16 %v1256, %v1254
    %v1269 = vpack.c.b16 %v1257, %v1255
    %v1270 = vpack.c.b16 %v1260, %v1258
    %v1271 = vpack.c.b16 %v1261, %v1259
    %v1272 = vpack.c.b16 %v1264, %v1262
    %v1273 = vpack.c.b16 %v1265, %v1263
    %vm1282 = vcmask 523264
    %v1284 = vsel %vm1282, %v1174, 0
    %v1287 = vsel %vm1282, %v1175, 0
    %v1290 = vsel %vm1282, %v1176, 0
    %v1293 = vsel %vm1282, %v1177, 0
    %v1296 = vsel %vm1282, %v1178, 0
    %v1299 = vsel %vm1282, %v1179, 0
    %v1302 = vsel %vm1282, %v1180, 0
    %v1305 = vsel %vm1282, %v1181, 0
    %v1308 = vsel %vm1282, %v1182, 0
    %v1311 = vsel %vm1282, %v1183, 0
    %v1314 = vsel %vm1282, %v1184, 0
    %v1317 = vsel %vm1282, %v1185, 0
    %v1320 = vsel %vm1282, %v1186, 0
    %v1323 = vsel %vm1282, %v1187, 0
    %v1326 = vsel %vm1282, %v1188, 0
    %v1329 = vsel %vm1282, %v1189, 0
    %v1332 = vsel %vm1282, %v1190, 0
    %v1335 = vsel %vm1282, %v1191, 0
    %v1338 = vsel %vm1282, %v1192, 0
    %v1341 = vsel %vm1282, %v1193, 0
    %v1344 = vsel %vm1282, %v1194, 0
    %v1347 = vsel %vm1282, %v1195, 0
    %v1350 = vsel %vm1282, %v1196, 0
    %v1353 = vsel %vm1282, %v1197, 0
    %v1356 = vsel %vm1282, %v1198, 0
    %v1359 = vsel %vm1282, %v1199, 0
    %v1362 = vsel %vm1282, %v1200, 0
    %v1365 = vsel %vm1282, %v1201, 0
    %v1368 = vsel %vm1282, %v1202, 0
    %v1371 = vsel %vm1282, %v1203, 0
    %v1374 = vsel %vm1282, %v1204, 0
    %v1377 = vsel %vm1282, %v1205, 0
    %v1380 = vsel %vm1282, %v1206, 0
    %v1383 = vsel %vm1282, %v1207, 0
    %v1386 = vsel %vm1282, %v1208, 0
    %v1389 = vsel %vm1282, %v1209, 0
    %v1392 = vsel %vm1282, %v1210, 0
    %v1395 = vsel %vm1282, %v1211, 0
    %v1398 = vsel %vm1282, %v1212, 0
    %v1401 = vsel %vm1282, %v1213, 0
    %v1404 = vsel %vm1282, %v1214, 0
    %v1407 = vsel %vm1282, %v1215, 0
    %v1410 = vsel %vm1282, %v1216, 0
    %v1413 = vsel %vm1282, %v1217, 0
    %v1416 = vsel %vm1282, %v1218, 0
    %v1419 = vsel %vm1282, %v1219, 0
    %v1422 = vsel %vm1282, %v1220, 0
    %v1425 = vsel %vm1282, %v1221, 0
    %1427 = vmatprep.subr.bf16.mxu0 %v1267
    %1428 = vmatpush1.bf16.msra.mxu0 %v1266
    %1429 = vmatprep.subr.bf16.mxu0 %v1269
    %1430 = vmatpush1.bf16.msra.mxu0 %v1268
    %1431 = vmatprep.subr.bf16.mxu0 %v1271
    %1432 = vmatpush1.bf16.msra.mxu0 %v1270
    %1433 = vmatprep.subr.bf16.mxu0 %v1273
    %1434 = vmatpush1.bf16.msra.mxu0 %v1272
    %1435 = vmatprep.subr.bf16.mxu0 0
    %1436 = vmatpush1.bf16.msra.mxu0 0
    %1437 = vmatprep.subr.bf16.mxu0 0
    %1438 = vmatpush1.bf16.msra.mxu0 0
    %1439 = vmatprep.subr.bf16.mxu0 0
    %1440 = vmatpush1.bf16.msra.mxu0 0
    %1441 = vmatprep.subr.bf16.mxu0 0
    %1442 = vmatpush1.bf16.msra.mxu0 0
    %1443 = vmatprep.subr.bf16.mxu0 0
    %1444 = vmatpush1.bf16.msra.mxu0 0
    %1445 = vmatprep.subr.bf16.mxu0 0
    %1446 = vmatpush1.bf16.msra.mxu0 0
    %1447 = vmatprep.subr.bf16.mxu0 0
    %1448 = vmatpush1.bf16.msra.mxu0 0
    %1449 = vmatprep.subr.bf16.mxu0 0
    %1450 = vmatpush1.bf16.msra.mxu0 0
    %1451 = vmatprep.subr.bf16.mxu0 0
    %1452 = vmatpush1.bf16.msra.mxu0 0
    %1453 = vmatprep.subr.bf16.mxu0 0
    %1454 = vmatpush1.bf16.msra.mxu0 0
    %1455 = vmatprep.subr.bf16.mxu0 0
    %1456 = vmatpush1.bf16.msra.mxu0 0
    %1457 = vmatprep.subr.bf16.mxu0 0
    %1458 = vmatpush1.bf16.msra.mxu0 0
    %1459 = vmatprep.mubr.bf16.mxu0 0
    %1460 = vmatmul.mubr.bf16.gmra.mrb[0].mxu0 %v1284
    %v1461 = vpop.f32.mrb[0].mxu0
    %v1462 = vadd.f32 %v1235, %v1461
    %v1463 = vpop.f32.mrb[0].mxu0
    %v1464 = vadd.f32 %v1239, %v1463
    %v1465 = vpop.f32.mrb[0].mxu0
    %v1466 = vadd.f32 %v1235, %v1465
    %v1467 = vpop.f32.mrb[0].mxu0
    %v1468 = vadd.f32 %v1239, %v1467
    %1469 = vmatprep.mubr.bf16.mxu0 0
    %1470 = vmatmul.mubr.bf16.gmra.mrb[0].mxu0 %v1287
    %v1471 = vpop.f32.mrb[0].mxu0
    %v1472 = vadd.f32 %v1235, %v1471
    %v1473 = vpop.f32.mrb[0].mxu0
    %v1474 = vadd.f32 %v1239, %v1473
    %v1475 = vpop.f32.mrb[0].mxu0
    %v1476 = vadd.f32 %v1235, %v1475
    %v1477 = vpop.f32.mrb[0].mxu0
    %v1478 = vadd.f32 %v1239, %v1477
    %1479 = vmatprep.mubr.bf16.mxu0 0
    %1480 = vmatmul.mubr.bf16.gmra.mrb[0].mxu0 %v1290
    %v1481 = vpop.f32.mrb[0].mxu0
    %v1482 = vadd.f32 %v1235, %v1481
    %v1483 = vpop.f32.mrb[0].mxu0
    %v1484 = vadd.f32 %v1239, %v1483
    %v1485 = vpop.f32.mrb[0].mxu0
    %v1486 = vadd.f32 %v1235, %v1485
    %v1487 = vpop.f32.mrb[0].mxu0
    %v1488 = vadd.f32 %v1239, %v1487
    %1489 = vmatprep.mubr.bf16.mxu0 0
    %1490 = vmatmul.mubr.bf16.gmra.mrb[0].mxu0 %v1293
    %v1491 = vpop.f32.mrb[0].mxu0
    %v1492 = vadd.f32 %v1235, %v1491
    %v1493 = vpop.f32.mrb[0].mxu0
    %v1494 = vadd.f32 %v1239, %v1493
    %v1495 = vpop.f32.mrb[0].mxu0
    %v1496 = vadd.f32 %v1235, %v1495
    %v1497 = vpop.f32.mrb[0].mxu0
    %v1498 = vadd.f32 %v1239, %v1497
    %1499 = vmatprep.mubr.bf16.mxu0 0
    %1500 = vmatmul.mubr.bf16.gmra.mrb[0].mxu0 %v1296
    %v1501 = vpop.f32.mrb[0].mxu0
    %v1502 = vadd.f32 %v1235, %v1501
    %v1503 = vpop.f32.mrb[0].mxu0
    %v1504 = vadd.f32 %v1239, %v1503
    %v1505 = vpop.f32.mrb[0].mxu0
    %v1506 = vadd.f32 %v1235, %v1505
    %v1507 = vpop.f32.mrb[0].mxu0
    %v1508 = vadd.f32 %v1239, %v1507
    %1509 = vmatprep.mubr.bf16.mxu0 0
    %1510 = vmatmul.mubr.bf16.gmra.mrb[0].mxu0 %v1299
    %v1511 = vpop.f32.mrb[0].mxu0
    %v1512 = vadd.f32 %v1235, %v1511
    %v1513 = vpop.f32.mrb[0].mxu0
    %v1514 = vadd.f32 %v1239, %v1513
    %v1515 = vpop.f32.mrb[0].mxu0
    %v1516 = vadd.f32 %v1235, %v1515
    %v1517 = vpop.f32.mrb[0].mxu0
    %v1518 = vadd.f32 %v1239, %v1517
    %1519 = vmatprep.mubr.bf16.mxu0 0
    %1520 = vmatmul.mubr.bf16.gmra.mrb[0].mxu0 %v1302
    %v1521 = vpop.f32.mrb[0].mxu0
    %v1522 = vadd.f32 %v1235, %v1521
    %v1523 = vpop.f32.mrb[0].mxu0
    %v1524 = vadd.f32 %v1239, %v1523
    %v1525 = vpop.f32.mrb[0].mxu0
    %v1526 = vadd.f32 %v1235, %v1525
    %v1527 = vpop.f32.mrb[0].mxu0
    %v1528 = vadd.f32 %v1239, %v1527
    %1529 = vmatprep.mubr.bf16.mxu0 0
    %1530 = vmatmul.mubr.bf16.gmra.mrb[0].mxu0 %v1305
    %v1531 = vpop.f32.mrb[0].mxu0
    %v1532 = vadd.f32 %v1235, %v1531
    %v1533 = vpop.f32.mrb[0].mxu0
    %v1534 = vadd.f32 %v1239, %v1533
    %v1535 = vpop.f32.mrb[0].mxu0
    %v1536 = vadd.f32 %v1235, %v1535
    %v1537 = vpop.f32.mrb[0].mxu0
    %v1538 = vadd.f32 %v1239, %v1537
    %1539 = vmatprep.mubr.bf16.mxu0 0
    %1540 = vmatmul.mubr.bf16.gmra.mrb[0].mxu0 %v1308
    %v1541 = vpop.f32.mrb[0].mxu0
    %v1542 = vadd.f32 %v1235, %v1541
    %v1543 = vpop.f32.mrb[0].mxu0
    %v1544 = vadd.f32 %v1239, %v1543
    %v1545 = vpop.f32.mrb[0].mxu0
    %v1546 = vadd.f32 %v1235, %v1545
    %v1547 = vpop.f32.mrb[0].mxu0
    %v1548 = vadd.f32 %v1239, %v1547
    %1549 = vmatprep.mubr.bf16.mxu0 0
    %1550 = vmatmul.mubr.bf16.gmra.mrb[0].mxu0 %v1311
    %v1551 = vpop.f32.mrb[0].mxu0
    %v1552 = vadd.f32 %v1235, %v1551
    %v1553 = vpop.f32.mrb[0].mxu0
    %v1554 = vadd.f32 %v1239, %v1553
    %v1555 = vpop.f32.mrb[0].mxu0
    %v1556 = vadd.f32 %v1235, %v1555
    %v1557 = vpop.f32.mrb[0].mxu0
    %v1558 = vadd.f32 %v1239, %v1557
    %1559 = vmatprep.mubr.bf16.mxu0 0
    %1560 = vmatmul.mubr.bf16.gmra.mrb[0].mxu0 %v1314
    %v1561 = vpop.f32.mrb[0].mxu0
    %v1562 = vadd.f32 %v1235, %v1561
    %v1563 = vpop.f32.mrb[0].mxu0
    %v1564 = vadd.f32 %v1239, %v1563
    %v1565 = vpop.f32.mrb[0].mxu0
    %v1566 = vadd.f32 %v1235, %v1565
    %v1567 = vpop.f32.mrb[0].mxu0
    %v1568 = vadd.f32 %v1239, %v1567
    %1569 = vmatprep.mubr.bf16.mxu0 0
    %1570 = vmatmul.mubr.bf16.gmra.mrb[0].mxu0 %v1317
    %v1571 = vpop.f32.mrb[0].mxu0
    %v1572 = vadd.f32 %v1235, %v1571
    %v1573 = vpop.f32.mrb[0].mxu0
    %v1574 = vadd.f32 %v1239, %v1573
    %v1575 = vpop.f32.mrb[0].mxu0
    %v1576 = vadd.f32 %v1235, %v1575
    %v1577 = vpop.f32.mrb[0].mxu0
    %v1578 = vadd.f32 %v1239, %v1577
    %1579 = vmatprep.mubr.bf16.mxu0 0
    %1580 = vmatmul.mubr.bf16.gmra.mrb[0].mxu0 %v1320
    %v1581 = vpop.f32.mrb[0].mxu0
    %v1582 = vadd.f32 %v1235, %v1581
    %v1583 = vpop.f32.mrb[0].mxu0
    %v1584 = vadd.f32 %v1239, %v1583
    %v1585 = vpop.f32.mrb[0].mxu0
    %v1586 = vadd.f32 %v1235, %v1585
    %v1587 = vpop.f32.mrb[0].mxu0
    %v1588 = vadd.f32 %v1239, %v1587
    %1589 = vmatprep.mubr.bf16.mxu0 0
    %1590 = vmatmul.mubr.bf16.gmra.mrb[0].mxu0 %v1323
    %v1591 = vpop.f32.mrb[0].mxu0
    %v1592 = vadd.f32 %v1235, %v1591
    %v1593 = vpop.f32.mrb[0].mxu0
    %v1594 = vadd.f32 %v1239, %v1593
    %v1595 = vpop.f32.mrb[0].mxu0
    %v1596 = vadd.f32 %v1235, %v1595
    %v1597 = vpop.f32.mrb[0].mxu0
    %v1598 = vadd.f32 %v1239, %v1597
    %1599 = vmatprep.mubr.bf16.mxu0 0
    %1600 = vmatmul.mubr.bf16.gmra.mrb[0].mxu0 %v1326
    %v1601 = vpop.f32.mrb[0].mxu0
    %v1602 = vadd.f32 %v1235, %v1601
    %v1603 = vpop.f32.mrb[0].mxu0
    %v1604 = vadd.f32 %v1239, %v1603
    %v1605 = vpop.f32.mrb[0].mxu0
    %v1606 = vadd.f32 %v1235, %v1605
    %v1607 = vpop.f32.mrb[0].mxu0
    %v1608 = vadd.f32 %v1239, %v1607
    %1609 = vmatprep.mubr.bf16.mxu0 0
    %1610 = vmatmul.mubr.bf16.gmra.mrb[0].mxu0 %v1329
    %v1611 = vpop.f32.mrb[0].mxu0
    %v1612 = vadd.f32 %v1235, %v1611
    %v1613 = vpop.f32.mrb[0].mxu0
    %v1614 = vadd.f32 %v1239, %v1613
    %v1615 = vpop.f32.mrb[0].mxu0
    %v1616 = vadd.f32 %v1235, %v1615
    %v1617 = vpop.f32.mrb[0].mxu0
    %v1618 = vadd.f32 %v1239, %v1617
    %1619 = vmatprep.mubr.bf16.mxu0 0
    %1620 = vmatmul.mubr.bf16.gmra.mrb[0].mxu0 %v1332
    %v1621 = vpop.f32.mrb[0].mxu0
    %v1622 = vadd.f32 %v1235, %v1621
    %v1623 = vpop.f32.mrb[0].mxu0
    %v1624 = vadd.f32 %v1239, %v1623
    %v1625 = vpop.f32.mrb[0].mxu0
    %v1626 = vadd.f32 %v1235, %v1625
    %v1627 = vpop.f32.mrb[0].mxu0
    %v1628 = vadd.f32 %v1239, %v1627
    %1629 = vmatprep.mubr.bf16.mxu0 0
    %1630 = vmatmul.mubr.bf16.gmra.mrb[0].mxu0 %v1335
    %v1631 = vpop.f32.mrb[0].mxu0
    %v1632 = vadd.f32 %v1235, %v1631
    %v1633 = vpop.f32.mrb[0].mxu0
    %v1634 = vadd.f32 %v1239, %v1633
    %v1635 = vpop.f32.mrb[0].mxu0
    %v1636 = vadd.f32 %v1235, %v1635
    %v1637 = vpop.f32.mrb[0].mxu0
    %v1638 = vadd.f32 %v1239, %v1637
    %1639 = vmatprep.mubr.bf16.mxu0 0
    %1640 = vmatmul.mubr.bf16.gmra.mrb[0].mxu0 %v1338
    %v1641 = vpop.f32.mrb[0].mxu0
    %v1642 = vadd.f32 %v1235, %v1641
    %v1643 = vpop.f32.mrb[0].mxu0
    %v1644 = vadd.f32 %v1239, %v1643
    %v1645 = vpop.f32.mrb[0].mxu0
    %v1646 = vadd.f32 %v1235, %v1645
    %v1647 = vpop.f32.mrb[0].mxu0
    %v1648 = vadd.f32 %v1239, %v1647
    %1649 = vmatprep.mubr.bf16.mxu0 0
    %1650 = vmatmul.mubr.bf16.gmra.mrb[0].mxu0 %v1341
    %v1651 = vpop.f32.mrb[0].mxu0
    %v1652 = vadd.f32 %v1235, %v1651
    %v1653 = vpop.f32.mrb[0].mxu0
    %v1654 = vadd.f32 %v1239, %v1653
    %v1655 = vpop.f32.mrb[0].mxu0
    %v1656 = vadd.f32 %v1235, %v1655
    %v1657 = vpop.f32.mrb[0].mxu0
    %v1658 = vadd.f32 %v1239, %v1657
    %1659 = vmatprep.mubr.bf16.mxu0 0
    %1660 = vmatmul.mubr.bf16.gmra.mrb[0].mxu0 %v1344
    %v1661 = vpop.f32.mrb[0].mxu0
    %v1662 = vadd.f32 %v1235, %v1661
    %v1663 = vpop.f32.mrb[0].mxu0
    %v1664 = vadd.f32 %v1239, %v1663
    %v1665 = vpop.f32.mrb[0].mxu0
    %v1666 = vadd.f32 %v1235, %v1665
    %v1667 = vpop.f32.mrb[0].mxu0
    %v1668 = vadd.f32 %v1239, %v1667
    %1669 = vmatprep.mubr.bf16.mxu0 0
    %1670 = vmatmul.mubr.bf16.gmra.mrb[0].mxu0 %v1347
    %v1671 = vpop.f32.mrb[0].mxu0
    %v1672 = vadd.f32 %v1235, %v1671
    %v1673 = vpop.f32.mrb[0].mxu0
    %v1674 = vadd.f32 %v1239, %v1673
    %v1675 = vpop.f32.mrb[0].mxu0
    %v1676 = vadd.f32 %v1235, %v1675
    %v1677 = vpop.f32.mrb[0].mxu0
    %v1678 = vadd.f32 %v1239, %v1677
    %1679 = vmatprep.mubr.bf16.mxu0 0
    %1680 = vmatmul.mubr.bf16.gmra.mrb[0].mxu0 %v1350
    %v1681 = vpop.f32.mrb[0].mxu0
    %v1682 = vadd.f32 %v1235, %v1681
    %v1683 = vpop.f32.mrb[0].mxu0
    %v1684 = vadd.f32 %v1239, %v1683
    %v1685 = vpop.f32.mrb[0].mxu0
    %v1686 = vadd.f32 %v1235, %v1685
    %v1687 = vpop.f32.mrb[0].mxu0
    %v1688 = vadd.f32 %v1239, %v1687
    %1689 = vmatprep.mubr.bf16.mxu0 0
    %1690 = vmatmul.mubr.bf16.gmra.mrb[0].mxu0 %v1353
    %v1691 = vpop.f32.mrb[0].mxu0
    %v1692 = vadd.f32 %v1235, %v1691
    %v1693 = vpop.f32.mrb[0].mxu0
    %v1694 = vadd.f32 %v1239, %v1693
    %v1695 = vpop.f32.mrb[0].mxu0
    %v1696 = vadd.f32 %v1235, %v1695
    %v1697 = vpop.f32.mrb[0].mxu0
    %v1698 = vadd.f32 %v1239, %v1697
    %1699 = vmatprep.mubr.bf16.mxu0 0
    %1700 = vmatmul.mubr.bf16.gmra.mrb[0].mxu0 %v1356
    %v1701 = vpop.f32.mrb[0].mxu0
    %v1702 = vadd.f32 %v1235, %v1701
    %v1703 = vpop.f32.mrb[0].mxu0
    %v1704 = vadd.f32 %v1239, %v1703
    %v1705 = vpop.f32.mrb[0].mxu0
    %v1706 = vadd.f32 %v1235, %v1705
    %v1707 = vpop.f32.mrb[0].mxu0
    %v1708 = vadd.f32 %v1239, %v1707
    %1709 = vmatprep.mubr.bf16.mxu0 0
    %1710 = vmatmul.mubr.bf16.gmra.mrb[0].mxu0 %v1359
    %v1711 = vpop.f32.mrb[0].mxu0
    %v1712 = vadd.f32 %v1235, %v1711
    %v1713 = vpop.f32.mrb[0].mxu0
    %v1714 = vadd.f32 %v1239, %v1713
    %v1715 = vpop.f32.mrb[0].mxu0
    %v1716 = vadd.f32 %v1235, %v1715
    %v1717 = vpop.f32.mrb[0].mxu0
    %v1718 = vadd.f32 %v1239, %v1717
    %1719 = vmatprep.mubr.bf16.mxu0 0
    %1720 = vmatmul.mubr.bf16.gmra.mrb[0].mxu0 %v1362
    %v1721 = vpop.f32.mrb[0].mxu0
    %v1722 = vadd.f32 %v1235, %v1721
    %v1723 = vpop.f32.mrb[0].mxu0
    %v1724 = vadd.f32 %v1239, %v1723
    %v1725 = vpop.f32.mrb[0].mxu0
    %v1726 = vadd.f32 %v1235, %v1725
    %v1727 = vpop.f32.mrb[0].mxu0
    %v1728 = vadd.f32 %v1239, %v1727
    %1729 = vmatprep.mubr.bf16.mxu0 0
    %1730 = vmatmul.mubr.bf16.gmra.mrb[0].mxu0 %v1365
    %v1731 = vpop.f32.mrb[0].mxu0
    %v1732 = vadd.f32 %v1235, %v1731
    %v1733 = vpop.f32.mrb[0].mxu0
    %v1734 = vadd.f32 %v1239, %v1733
    %v1735 = vpop.f32.mrb[0].mxu0
    %v1736 = vadd.f32 %v1235, %v1735
    %v1737 = vpop.f32.mrb[0].mxu0
    %v1738 = vadd.f32 %v1239, %v1737
    %1739 = vmatprep.mubr.bf16.mxu0 0
    %1740 = vmatmul.mubr.bf16.gmra.mrb[0].mxu0 %v1368
    %v1741 = vpop.f32.mrb[0].mxu0
    %v1742 = vadd.f32 %v1235, %v1741
    %v1743 = vpop.f32.mrb[0].mxu0
    %v1744 = vadd.f32 %v1239, %v1743
    %v1745 = vpop.f32.mrb[0].mxu0
    %v1746 = vadd.f32 %v1235, %v1745
    %v1747 = vpop.f32.mrb[0].mxu0
    %v1748 = vadd.f32 %v1239, %v1747
    %1749 = vmatprep.mubr.bf16.mxu0 0
    %1750 = vmatmul.mubr.bf16.gmra.mrb[0].mxu0 %v1371
    %v1751 = vpop.f32.mrb[0].mxu0
    %v1752 = vadd.f32 %v1235, %v1751
    %v1753 = vpop.f32.mrb[0].mxu0
    %v1754 = vadd.f32 %v1239, %v1753
    %v1755 = vpop.f32.mrb[0].mxu0
    %v1756 = vadd.f32 %v1235, %v1755
    %v1757 = vpop.f32.mrb[0].mxu0
    %v1758 = vadd.f32 %v1239, %v1757
    %1759 = vmatprep.mubr.bf16.mxu0 0
    %1760 = vmatmul.mubr.bf16.gmra.mrb[0].mxu0 %v1374
    %v1761 = vpop.f32.mrb[0].mxu0
    %v1762 = vadd.f32 %v1235, %v1761
    %v1763 = vpop.f32.mrb[0].mxu0
    %v1764 = vadd.f32 %v1239, %v1763
    %v1765 = vpop.f32.mrb[0].mxu0
    %v1766 = vadd.f32 %v1235, %v1765
    %v1767 = vpop.f32.mrb[0].mxu0
    %v1768 = vadd.f32 %v1239, %v1767
    %1769 = vmatprep.mubr.bf16.mxu0 0
    %1770 = vmatmul.mubr.bf16.gmra.mrb[0].mxu0 %v1377
    %v1771 = vpop.f32.mrb[0].mxu0
    %v1772 = vadd.f32 %v1235, %v1771
    %v1773 = vpop.f32.mrb[0].mxu0
    %v1774 = vadd.f32 %v1239, %v1773
    %v1775 = vpop.f32.mrb[0].mxu0
    %v1776 = vadd.f32 %v1235, %v1775
    %v1777 = vpop.f32.mrb[0].mxu0
    %v1778 = vadd.f32 %v1239, %v1777
    %1779 = vmatprep.mubr.bf16.mxu0 0
    %1780 = vmatmul.mubr.bf16.gmra.mrb[0].mxu0 %v1380
    %v1781 = vpop.f32.mrb[0].mxu0
    %v1782 = vadd.f32 %v1235, %v1781
    %v1783 = vpop.f32.mrb[0].mxu0
    %v1784 = vadd.f32 %v1239, %v1783
    %v1785 = vpop.f32.mrb[0].mxu0
    %v1786 = vadd.f32 %v1235, %v1785
    %v1787 = vpop.f32.mrb[0].mxu0
    %v1788 = vadd.f32 %v1239, %v1787
    %1789 = vmatprep.mubr.bf16.mxu0 0
    %1790 = vmatmul.mubr.bf16.gmra.mrb[0].mxu0 %v1383
    %v1791 = vpop.f32.mrb[0].mxu0
    %v1792 = vadd.f32 %v1235, %v1791
    %v1793 = vpop.f32.mrb[0].mxu0
    %v1794 = vadd.f32 %v1239, %v1793
    %v1795 = vpop.f32.mrb[0].mxu0
    %v1796 = vadd.f32 %v1235, %v1795
    %v1797 = vpop.f32.mrb[0].mxu0
    %v1798 = vadd.f32 %v1239, %v1797
    %1799 = vmatprep.mubr.bf16.mxu0 0
    %1800 = vmatmul.mubr.bf16.gmra.mrb[0].mxu0 %v1386
    %v1801 = vpop.f32.mrb[0].mxu0
    %v1802 = vadd.f32 %v1235, %v1801
    %v1803 = vpop.f32.mrb[0].mxu0
    %v1804 = vadd.f32 %v1239, %v1803
    %v1805 = vpop.f32.mrb[0].mxu0
    %v1806 = vadd.f32 %v1235, %v1805
    %v1807 = vpop.f32.mrb[0].mxu0
    %v1808 = vadd.f32 %v1239, %v1807
    %1809 = vmatprep.mubr.bf16.mxu0 0
    %1810 = vmatmul.mubr.bf16.gmra.mrb[0].mxu0 %v1389
    %v1811 = vpop.f32.mrb[0].mxu0
    %v1812 = vadd.f32 %v1235, %v1811
    %v1813 = vpop.f32.mrb[0].mxu0
    %v1814 = vadd.f32 %v1239, %v1813
    %v1815 = vpop.f32.mrb[0].mxu0
    %v1816 = vadd.f32 %v1235, %v1815
    %v1817 = vpop.f32.mrb[0].mxu0
    %v1818 = vadd.f32 %v1239, %v1817
    %1819 = vmatprep.mubr.bf16.mxu0 0
    %1820 = vmatmul.mubr.bf16.gmra.mrb[0].mxu0 %v1392
    %v1821 = vpop.f32.mrb[0].mxu0
    %v1822 = vadd.f32 %v1235, %v1821
    %v1823 = vpop.f32.mrb[0].mxu0
    %v1824 = vadd.f32 %v1239, %v1823
    %v1825 = vpop.f32.mrb[0].mxu0
    %v1826 = vadd.f32 %v1235, %v1825
    %v1827 = vpop.f32.mrb[0].mxu0
    %v1828 = vadd.f32 %v1239, %v1827
    %1829 = vmatprep.mubr.bf16.mxu0 0
    %1830 = vmatmul.mubr.bf16.gmra.mrb[0].mxu0 %v1395
    %v1831 = vpop.f32.mrb[0].mxu0
    %v1832 = vadd.f32 %v1235, %v1831
    %v1833 = vpop.f32.mrb[0].mxu0
    %v1834 = vadd.f32 %v1239, %v1833
    %v1835 = vpop.f32.mrb[0].mxu0
    %v1836 = vadd.f32 %v1235, %v1835
    %v1837 = vpop.f32.mrb[0].mxu0
    %v1838 = vadd.f32 %v1239, %v1837
    %1839 = vmatprep.mubr.bf16.mxu0 0
    %1840 = vmatmul.mubr.bf16.gmra.mrb[0].mxu0 %v1398
    %v1841 = vpop.f32.mrb[0].mxu0
    %v1842 = vadd.f32 %v1235, %v1841
    %v1843 = vpop.f32.mrb[0].mxu0
    %v1844 = vadd.f32 %v1239, %v1843
    %v1845 = vpop.f32.mrb[0].mxu0
    %v1846 = vadd.f32 %v1235, %v1845
    %v1847 = vpop.f32.mrb[0].mxu0
    %v1848 = vadd.f32 %v1239, %v1847
    %1849 = vmatprep.mubr.bf16.mxu0 0
    %1850 = vmatmul.mubr.bf16.gmra.mrb[0].mxu0 %v1401
    %v1851 = vpop.f32.mrb[0].mxu0
    %v1852 = vadd.f32 %v1235, %v1851
    %v1853 = vpop.f32.mrb[0].mxu0
    %v1854 = vadd.f32 %v1239, %v1853
    %v1855 = vpop.f32.mrb[0].mxu0
    %v1856 = vadd.f32 %v1235, %v1855
    %v1857 = vpop.f32.mrb[0].mxu0
    %v1858 = vadd.f32 %v1239, %v1857
    %1859 = vmatprep.mubr.bf16.mxu0 0
    %1860 = vmatmul.mubr.bf16.gmra.mrb[0].mxu0 %v1404
    %v1861 = vpop.f32.mrb[0].mxu0
    %v1862 = vadd.f32 %v1235, %v1861
    %v1863 = vpop.f32.mrb[0].mxu0
    %v1864 = vadd.f32 %v1239, %v1863
    %v1865 = vpop.f32.mrb[0].mxu0
    %v1866 = vadd.f32 %v1235, %v1865
    %v1867 = vpop.f32.mrb[0].mxu0
    %v1868 = vadd.f32 %v1239, %v1867
    %1869 = vmatprep.mubr.bf16.mxu0 0
    %1870 = vmatmul.mubr.bf16.gmra.mrb[0].mxu0 %v1407
    %v1871 = vpop.f32.mrb[0].mxu0
    %v1872 = vadd.f32 %v1235, %v1871
    %v1873 = vpop.f32.mrb[0].mxu0
    %v1874 = vadd.f32 %v1239, %v1873
    %v1875 = vpop.f32.mrb[0].mxu0
    %v1876 = vadd.f32 %v1235, %v1875
    %v1877 = vpop.f32.mrb[0].mxu0
    %v1878 = vadd.f32 %v1239, %v1877
    %1879 = vmatprep.mubr.bf16.mxu0 0
    %1880 = vmatmul.mubr.bf16.gmra.mrb[0].mxu0 %v1410
    %v1881 = vpop.f32.mrb[0].mxu0
    %v1882 = vadd.f32 %v1235, %v1881
    %v1883 = vpop.f32.mrb[0].mxu0
    %v1884 = vadd.f32 %v1239, %v1883
    %v1885 = vpop.f32.mrb[0].mxu0
    %v1886 = vadd.f32 %v1235, %v1885
    %v1887 = vpop.f32.mrb[0].mxu0
    %v1888 = vadd.f32 %v1239, %v1887
    %1889 = vmatprep.mubr.bf16.mxu0 0
    %1890 = vmatmul.mubr.bf16.gmra.mrb[0].mxu0 %v1413
    %v1891 = vpop.f32.mrb[0].mxu0
    %v1892 = vadd.f32 %v1235, %v1891
    %v1893 = vpop.f32.mrb[0].mxu0
    %v1894 = vadd.f32 %v1239, %v1893
    %v1895 = vpop.f32.mrb[0].mxu0
    %v1896 = vadd.f32 %v1235, %v1895
    %v1897 = vpop.f32.mrb[0].mxu0
    %v1898 = vadd.f32 %v1239, %v1897
    %1899 = vmatprep.mubr.bf16.mxu0 0
    %1900 = vmatmul.mubr.bf16.gmra.mrb[0].mxu0 %v1416
    %v1901 = vpop.f32.mrb[0].mxu0
    %v1902 = vadd.f32 %v1235, %v1901
    %v1903 = vpop.f32.mrb[0].mxu0
    %v1904 = vadd.f32 %v1239, %v1903
    %v1905 = vpop.f32.mrb[0].mxu0
    %v1906 = vadd.f32 %v1235, %v1905
    %v1907 = vpop.f32.mrb[0].mxu0
    %v1908 = vadd.f32 %v1239, %v1907
    %1909 = vmatprep.mubr.bf16.mxu0 0
    %1910 = vmatmul.mubr.bf16.gmra.mrb[0].mxu0 %v1419
    %v1911 = vpop.f32.mrb[0].mxu0
    %v1912 = vadd.f32 %v1235, %v1911
    %v1913 = vpop.f32.mrb[0].mxu0
    %v1914 = vadd.f32 %v1239, %v1913
    %v1915 = vpop.f32.mrb[0].mxu0
    %v1916 = vadd.f32 %v1235, %v1915
    %v1917 = vpop.f32.mrb[0].mxu0
    %v1918 = vadd.f32 %v1239, %v1917
    %1919 = vmatprep.mubr.bf16.mxu0 0
    %1920 = vmatmul.mubr.bf16.gmra.mrb[0].mxu0 %v1422
    %v1921 = vpop.f32.mrb[0].mxu0
    %v1922 = vadd.f32 %v1235, %v1921
    %v1923 = vpop.f32.mrb[0].mxu0
    %v1924 = vadd.f32 %v1239, %v1923
    %v1925 = vpop.f32.mrb[0].mxu0
    %v1926 = vadd.f32 %v1235, %v1925
    %v1927 = vpop.f32.mrb[0].mxu0
    %v1928 = vadd.f32 %v1239, %v1927
    %1929 = vmatprep.mubr.bf16.mxu0 0
    %1930 = vmatmul.mubr.bf16.gmra.mrb[0].mxu0 %v1425
    %v1931 = vpop.f32.mrb[0].mxu0
    %v1932 = vadd.f32 %v1235, %v1931
    %v1933 = vpop.f32.mrb[0].mxu0
    %v1934 = vadd.f32 %v1239, %v1933
    %v1935 = vpop.f32.mrb[0].mxu0
    %v1936 = vadd.f32 %v1235, %v1935
    %v1937 = vpop.f32.mrb[0].mxu0
    %v1938 = vadd.f32 %v1239, %v1937
    %1939 = vdwg.mxu0
    %v1940 = vmax.f32 %v1462, %v1472
    %v1941 = vmax.f32 %v1940, %v1482
    %v1942 = vmax.f32 %v1941, %v1492
    %v1943 = vmax.f32 %v1942, %v1502
    %v1944 = vmax.f32 %v1943, %v1512
    %v1945 = vmax.f32 %v1944, %v1522
    %v1946 = vmax.f32 %v1945, %v1532
    %v1947 = vmax.f32 %v1464, %v1474
    %v1948 = vmax.f32 %v1947, %v1484
    %v1949 = vmax.f32 %v1948, %v1494
    %v1950 = vmax.f32 %v1949, %v1504
    %v1951 = vmax.f32 %v1950, %v1514
    %v1952 = vmax.f32 %v1951, %v1524
    %v1953 = vmax.f32 %v1952, %v1534
    %v1954 = vmax.f32 %v1466, %v1476
    %v1955 = vmax.f32 %v1954, %v1486
    %v1956 = vmax.f32 %v1955, %v1496
    %v1957 = vmax.f32 %v1956, %v1506
    %v1958 = vmax.f32 %v1957, %v1516
    %v1959 = vmax.f32 %v1958, %v1526
    %v1960 = vmax.f32 %v1959, %v1536
    %v1961 = vmax.f32 %v1468, %v1478
    %v1962 = vmax.f32 %v1961, %v1488
    %v1963 = vmax.f32 %v1962, %v1498
    %v1964 = vmax.f32 %v1963, %v1508
    %v1965 = vmax.f32 %v1964, %v1518
    %v1966 = vmax.f32 %v1965, %v1528
    %v1967 = vmax.f32 %v1966, %v1538
    %v1968 = vmax.f32 %v1542, %v1552
    %v1969 = vmax.f32 %v1968, %v1562
    %v1970 = vmax.f32 %v1969, %v1572
    %v1971 = vmax.f32 %v1970, %v1582
    %v1972 = vmax.f32 %v1971, %v1592
    %v1973 = vmax.f32 %v1972, %v1602
    %v1974 = vmax.f32 %v1973, %v1612
    %v1975 = vmax.f32 %v1544, %v1554
    %v1976 = vmax.f32 %v1975, %v1564
    %v1977 = vmax.f32 %v1976, %v1574
    %v1978 = vmax.f32 %v1977, %v1584
    %v1979 = vmax.f32 %v1978, %v1594
    %v1980 = vmax.f32 %v1979, %v1604
    %v1981 = vmax.f32 %v1980, %v1614
    %v1982 = vmax.f32 %v1546, %v1556
    %v1983 = vmax.f32 %v1982, %v1566
    %v1984 = vmax.f32 %v1983, %v1576
    %v1985 = vmax.f32 %v1984, %v1586
    %v1986 = vmax.f32 %v1985, %v1596
    %v1987 = vmax.f32 %v1986, %v1606
    %v1988 = vmax.f32 %v1987, %v1616
    %v1989 = vmax.f32 %v1548, %v1558
    %v1990 = vmax.f32 %v1989, %v1568
    %v1991 = vmax.f32 %v1990, %v1578
    %v1992 = vmax.f32 %v1991, %v1588
    %v1993 = vmax.f32 %v1992, %v1598
    %v1994 = vmax.f32 %v1993, %v1608
    %v1995 = vmax.f32 %v1994, %v1618
    %v1996 = vmax.f32 %v1622, %v1632
    %v1997 = vmax.f32 %v1996, %v1642
    %v1998 = vmax.f32 %v1997, %v1652
    %v1999 = vmax.f32 %v1998, %v1662
    %v2000 = vmax.f32 %v1999, %v1672
    %v2001 = vmax.f32 %v2000, %v1682
    %v2002 = vmax.f32 %v2001, %v1692
    %v2003 = vmax.f32 %v1624, %v1634
    %v2004 = vmax.f32 %v2003, %v1644
    %v2005 = vmax.f32 %v2004, %v1654
    %v2006 = vmax.f32 %v2005, %v1664
    %v2007 = vmax.f32 %v2006, %v1674
    %v2008 = vmax.f32 %v2007, %v1684
    %v2009 = vmax.f32 %v2008, %v1694
    %v2010 = vmax.f32 %v1626, %v1636
    %v2011 = vmax.f32 %v2010, %v1646
    %v2012 = vmax.f32 %v2011, %v1656
    %v2013 = vmax.f32 %v2012, %v1666
    %v2014 = vmax.f32 %v2013, %v1676
    %v2015 = vmax.f32 %v2014, %v1686
    %v2016 = vmax.f32 %v2015, %v1696
    %v2017 = vmax.f32 %v1628, %v1638
    %v2018 = vmax.f32 %v2017, %v1648
    %v2019 = vmax.f32 %v2018, %v1658
    %v2020 = vmax.f32 %v2019, %v1668
    %v2021 = vmax.f32 %v2020, %v1678
    %v2022 = vmax.f32 %v2021, %v1688
    %v2023 = vmax.f32 %v2022, %v1698
    %v2024 = vmax.f32 %v1702, %v1712
    %v2025 = vmax.f32 %v2024, %v1722
    %v2026 = vmax.f32 %v2025, %v1732
    %v2027 = vmax.f32 %v2026, %v1742
    %v2028 = vmax.f32 %v2027, %v1752
    %v2029 = vmax.f32 %v2028, %v1762
    %v2030 = vmax.f32 %v2029, %v1772
    %v2031 = vmax.f32 %v1704, %v1714
    %v2032 = vmax.f32 %v2031, %v1724
    %v2033 = vmax.f32 %v2032, %v1734
    %v2034 = vmax.f32 %v2033, %v1744
    %v2035 = vmax.f32 %v2034, %v1754
    %v2036 = vmax.f32 %v2035, %v1764
    %v2037 = vmax.f32 %v2036, %v1774
    %v2038 = vmax.f32 %v1706, %v1716
    %v2039 = vmax.f32 %v2038, %v1726
    %v2040 = vmax.f32 %v2039, %v1736
    %v2041 = vmax.f32 %v2040, %v1746
    %v2042 = vmax.f32 %v2041, %v1756
    %v2043 = vmax.f32 %v2042, %v1766
    %v2044 = vmax.f32 %v2043, %v1776
    %v2045 = vmax.f32 %v1708, %v1718
    %v2046 = vmax.f32 %v2045, %v1728
    %v2047 = vmax.f32 %v2046, %v1738
    %v2048 = vmax.f32 %v2047, %v1748
    %v2049 = vmax.f32 %v2048, %v1758
    %v2050 = vmax.f32 %v2049, %v1768
    %v2051 = vmax.f32 %v2050, %v1778
    %v2052 = vmax.f32 %v1782, %v1792
    %v2053 = vmax.f32 %v2052, %v1802
    %v2054 = vmax.f32 %v2053, %v1812
    %v2055 = vmax.f32 %v2054, %v1822
    %v2056 = vmax.f32 %v2055, %v1832
    %v2057 = vmax.f32 %v2056, %v1842
    %v2058 = vmax.f32 %v2057, %v1852
    %v2059 = vmax.f32 %v1784, %v1794
    %v2060 = vmax.f32 %v2059, %v1804
    %v2061 = vmax.f32 %v2060, %v1814
    %v2062 = vmax.f32 %v2061, %v1824
    %v2063 = vmax.f32 %v2062, %v1834
    %v2064 = vmax.f32 %v2063, %v1844
    %v2065 = vmax.f32 %v2064, %v1854
    %v2066 = vmax.f32 %v1786, %v1796
    %v2067 = vmax.f32 %v2066, %v1806
    %v2068 = vmax.f32 %v2067, %v1816
    %v2069 = vmax.f32 %v2068, %v1826
    %v2070 = vmax.f32 %v2069, %v1836
    %v2071 = vmax.f32 %v2070, %v1846
    %v2072 = vmax.f32 %v2071, %v1856
    %v2073 = vmax.f32 %v1788, %v1798
    %v2074 = vmax.f32 %v2073, %v1808
    %v2075 = vmax.f32 %v2074, %v1818
    %v2076 = vmax.f32 %v2075, %v1828
    %v2077 = vmax.f32 %v2076, %v1838
    %v2078 = vmax.f32 %v2077, %v1848
    %v2079 = vmax.f32 %v2078, %v1858
    %v2080 = vmax.f32 %v1862, %v1872
    %v2081 = vmax.f32 %v2080, %v1882
    %v2082 = vmax.f32 %v2081, %v1892
    %v2083 = vmax.f32 %v2082, %v1902
    %v2084 = vmax.f32 %v2083, %v1912
    %v2085 = vmax.f32 %v2084, %v1922
    %v2086 = vmax.f32 %v2085, %v1932
    %v2087 = vmax.f32 %v1864, %v1874
    %v2088 = vmax.f32 %v2087, %v1884
    %v2089 = vmax.f32 %v2088, %v1894
    %v2090 = vmax.f32 %v2089, %v1904
    %v2091 = vmax.f32 %v2090, %v1914
    %v2092 = vmax.f32 %v2091, %v1924
    %v2093 = vmax.f32 %v2092, %v1934
    %v2094 = vmax.f32 %v1866, %v1876
    %v2095 = vmax.f32 %v2094, %v1886
    %v2096 = vmax.f32 %v2095, %v1896
    %v2097 = vmax.f32 %v2096, %v1906
    %v2098 = vmax.f32 %v2097, %v1916
    %v2099 = vmax.f32 %v2098, %v1926
    %v2100 = vmax.f32 %v2099, %v1936
    %v2101 = vmax.f32 %v1868, %v1878
    %v2102 = vmax.f32 %v2101, %v1888
    %v2103 = vmax.f32 %v2102, %v1898
    %v2104 = vmax.f32 %v2103, %v1908
    %v2105 = vmax.f32 %v2104, %v1918
    %v2106 = vmax.f32 %v2105, %v1928
    %v2107 = vmax.f32 %v2106, %v1938
    %v2108 = vadd.f32 %v1946, %v1960
    %v2109 = vrot.slane %v2108, 4
    %v2110 = vadd.f32 %v2108, %v2109
    %v2111 = vrot.slane %v2110, 2
    %v2112 = vadd.f32 %v2110, %v2111
    %v2113 = vrot.slane %v2112, 1
    %v2114 = vadd.f32 %v2112, %v2113
    %v2115 = vadd.f32 %v1953, %v1967
    %v2116 = vrot.slane %v2115, 4
    %v2117 = vadd.f32 %v2115, %v2116
    %v2118 = vrot.slane %v2117, 2
    %v2119 = vadd.f32 %v2117, %v2118
    %v2120 = vrot.slane %v2119, 1
    %v2121 = vadd.f32 %v2119, %v2120
    %v2122 = vadd.f32 %v1974, %v1988
    %v2123 = vrot.slane %v2122, 4
    %v2124 = vadd.f32 %v2122, %v2123
    %v2125 = vrot.slane %v2124, 2
    %v2126 = vadd.f32 %v2124, %v2125
    %v2127 = vrot.slane %v2126, 1
    %v2128 = vadd.f32 %v2126, %v2127
    %v2129 = vadd.f32 %v1981, %v1995
    %v2130 = vrot.slane %v2129, 4
    %v2131 = vadd.f32 %v2129, %v2130
    %v2132 = vrot.slane %v2131, 2
    %v2133 = vadd.f32 %v2131, %v2132
    %v2134 = vrot.slane %v2133, 1
    %v2135 = vadd.f32 %v2133, %v2134
    %v2136 = vadd.f32 %v2002, %v2016
    %v2137 = vrot.slane %v2136, 4
    %v2138 = vadd.f32 %v2136, %v2137
    %v2139 = vrot.slane %v2138, 2
    %v2140 = vadd.f32 %v2138, %v2139
    %v2141 = vrot.slane %v2140, 1
    %v2142 = vadd.f32 %v2140, %v2141
    %v2143 = vadd.f32 %v2009, %v2023
    %v2144 = vrot.slane %v2143, 4
    %v2145 = vadd.f32 %v2143, %v2144
    %v2146 = vrot.slane %v2145, 2
    %v2147 = vadd.f32 %v2145, %v2146
    %v2148 = vrot.slane %v2147, 1
    %v2149 = vadd.f32 %v2147, %v2148
    %v2150 = vadd.f32 %v2030, %v2044
    %v2151 = vrot.slane %v2150, 4
    %v2152 = vadd.f32 %v2150, %v2151
    %v2153 = vrot.slane %v2152, 2
    %v2154 = vadd.f32 %v2152, %v2153
    %v2155 = vrot.slane %v2154, 1
    %v2156 = vadd.f32 %v2154, %v2155
    %v2157 = vadd.f32 %v2037, %v2051
    %v2158 = vrot.slane %v2157, 4
    %v2159 = vadd.f32 %v2157, %v2158
    %v2160 = vrot.slane %v2159, 2
    %v2161 = vadd.f32 %v2159, %v2160
    %v2162 = vrot.slane %v2161, 1
    %v2163 = vadd.f32 %v2161, %v2162
    %v2164 = vadd.f32 %v2058, %v2072
    %v2165 = vrot.slane %v2164, 4
    %v2166 = vadd.f32 %v2164, %v2165
    %v2167 = vrot.slane %v2166, 2
    %v2168 = vadd.f32 %v2166, %v2167
    %v2169 = vrot.slane %v2168, 1
    %v2170 = vadd.f32 %v2168, %v2169
    %v2171 = vadd.f32 %v2065, %v2079
    %v2172 = vrot.slane %v2171, 4
    %v2173 = vadd.f32 %v2171, %v2172
    %v2174 = vrot.slane %v2173, 2
    %v2175 = vadd.f32 %v2173, %v2174
    %v2176 = vrot.slane %v2175, 1
    %v2177 = vadd.f32 %v2175, %v2176
    %v2178 = vadd.f32 %v2086, %v2100
    %v2179 = vrot.slane %v2178, 4
    %v2180 = vadd.f32 %v2178, %v2179
    %v2181 = vrot.slane %v2180, 2
    %v2182 = vadd.f32 %v2180, %v2181
    %v2183 = vrot.slane %v2182, 1
    %v2184 = vadd.f32 %v2182, %v2183
    %v2185 = vadd.f32 %v2093, %v2107
    %v2186 = vrot.slane %v2185, 4
    %v2187 = vadd.f32 %v2185, %v2186
    %v2188 = vrot.slane %v2187, 2
    %v2189 = vadd.f32 %v2187, %v2188
    %v2190 = vrot.slane %v2189, 1
    %v2191 = vadd.f32 %v2189, %v2190
    %v2192 = vpack.c.bf16 %v2114, %v2114
    %v2193 = vpack.c.bf16 %v2121, %v2121
    %v2194 = vpack.c.bf16 %v2128, %v2128
    %v2195 = vpack.c.bf16 %v2135, %v2135
    %v2196 = vpack.c.bf16 %v2142, %v2142
    %v2197 = vpack.c.bf16 %v2149, %v2149
    %v2198 = vpack.c.bf16 %v2156, %v2156
    %v2199 = vpack.c.bf16 %v2163, %v2163
    %v2200 = vpack.c.bf16 %v2170, %v2170
    %v2201 = vpack.c.bf16 %v2177, %v2177
    %v2202 = vpack.c.bf16 %v2184, %v2184
    %v2203 = vpack.c.bf16 %v2191, %v2191
    %v2204 = vld [vmem:[#allocation17] sm:$0xf]
    %v2205 = vld [vmem:[#allocation17 + $0x4] sm:$0xf]
    %v2206 = vld [vmem:[#allocation17 + $0x8] sm:$0xf]
    %v2207 = vld [vmem:[#allocation17 + $0xc] sm:$0xf]
    %v2208 = vld [vmem:[#allocation17 + $0x10] sm:$0xf]
    %v2209 = vld [vmem:[#allocation17 + $0x14] sm:$0xf]
    %v2210 = vld [vmem:[#allocation17 + $0x18] sm:$0xf]
    %v2211 = vld [vmem:[#allocation17 + $0x1c] sm:$0xf]
    %v2212 = vld [vmem:[#allocation17 + $0x20] sm:$0xf]
    %v2213 = vld [vmem:[#allocation17 + $0x24] sm:$0xf]
    %v2214 = vld [vmem:[#allocation17 + $0x28] sm:$0xf]
    %v2215 = vld [vmem:[#allocation17 + $0x2c] sm:$0xf]
    %v2216 = vld [vmem:[#allocation17 + $0x30] sm:$0xf]
    %v2217 = vld [vmem:[#allocation17 + $0x34] sm:$0xf]
    %v2218 = vld [vmem:[#allocation17 + $0x38] sm:$0xf]
    %v2219 = vld [vmem:[#allocation17 + $0x3c] sm:$0xf]
    %v2220 = vld [vmem:[#allocation17 + $0x40] sm:$0xf]
    %v2221 = vld [vmem:[#allocation17 + $0x44] sm:$0xf]
    %v2222 = vld [vmem:[#allocation17 + $0x48] sm:$0xf]
    %v2223 = vld [vmem:[#allocation17 + $0x4c] sm:$0xf]
    %v2224 = vld [vmem:[#allocation17 + $0x50] sm:$0xf]
    %v2225 = vld [vmem:[#allocation17 + $0x54] sm:$0xf]
    %v2226 = vld [vmem:[#allocation17 + $0x58] sm:$0xf]
    %v2227 = vld [vmem:[#allocation17 + $0x5c] sm:$0xf]
    %v2228 = vld [vmem:[#allocation17 + $0x60] sm:$0xf]
    %v2229 = vld [vmem:[#allocation17 + $0x64] sm:$0xf]
    %v2230 = vld [vmem:[#allocation17 + $0x68] sm:$0xf]
    %v2231 = vld [vmem:[#allocation17 + $0x6c] sm:$0xf]
    %v2232 = vld [vmem:[#allocation17 + $0x70] sm:$0xf]
    %v2233 = vld [vmem:[#allocation17 + $0x74] sm:$0xf]
    %v2234 = vld [vmem:[#allocation17 + $0x78] sm:$0xf]
    %v2235 = vld [vmem:[#allocation17 + $0x7c] sm:$0xf]
    %v2236 = vld [vmem:[#allocation19] sm:$0x1]
    %v2238 = vlaneseq
    %v2239 = vshrl.u32 %v2238, 7
    %v2240 = vsub.s32 0, %v2239
    %v2241 = vrot.slane %v2236, %v2240
    %v2255 = vunpack.c.l.b16 %v2192
    %v2256 = vunpack.c.l.b16 %v2193
    %v2257 = vunpack.c.l.b16 %v2194
    %v2258 = vunpack.c.l.b16 %v2195
    %v2259 = vunpack.c.l.b16 %v2196
    %v2260 = vunpack.c.l.b16 %v2197
    %v2261 = vunpack.c.l.b16 %v2198
    %v2262 = vunpack.c.l.b16 %v2199
    %v2263 = vunpack.c.l.b16 %v2200
    %v2264 = vunpack.c.l.b16 %v2201
    %v2265 = vunpack.c.l.b16 %v2202
    %v2266 = vunpack.c.l.b16 %v2203
    %vm2267 = vcmask 1041409
    %v2268 = vsel %vm2267, %v2257, %v2255
    %vm2269 = vcmask 1042434
    %v2270 = vsel %vm2269, %v2259, %v2268
    %vm2271 = vcmask 1043459
    %v2272 = vsel %vm2271, %v2261, %v2270
    %vm2273 = vcmask 1044484
    %v2274 = vsel %vm2273, %v2263, %v2272
    %vm2275 = vcmask 1045509
    %v2276 = vsel %vm2275, %v2265, %v2274
    %v2277 = vsel %vm2267, %v2258, %v2256
    %v2278 = vsel %vm2269, %v2260, %v2277
    %v2279 = vsel %vm2271, %v2262, %v2278
    %v2280 = vsel %vm2273, %v2264, %v2279
    %v2281 = vsel %vm2275, %v2266, %v2280
    %v2282 = vpack.c.b16 %v2276, %v2276
    %v2283 = vpack.c.b16 %v2281, %v2281
    %v2318 = vunpack.c.l.b16 %v2204
    %v2319 = vunpack.c.l.b16 %v2205
    %v2320 = vunpack.c.l.b16 %v2206
    %v2321 = vunpack.c.l.b16 %v2207
    %v2322 = vunpack.c.l.b16 %v2208
    %v2323 = vunpack.c.l.b16 %v2209
    %v2324 = vunpack.c.l.b16 %v2210
    %v2325 = vunpack.c.l.b16 %v2211
    %v2326 = vunpack.c.l.b16 %v2212
    %v2327 = vunpack.c.l.b16 %v2213
    %v2328 = vunpack.c.l.b16 %v2214
    %v2329 = vunpack.c.l.b16 %v2215
    %v2330 = vunpack.c.l.b16 %v2216
    %v2331 = vunpack.c.l.b16 %v2217
    %v2332 = vunpack.c.l.b16 %v2218
    %v2333 = vunpack.c.l.b16 %v2219
    %v2334 = vunpack.c.l.b16 %v2220
    %v2335 = vunpack.c.l.b16 %v2221
    %v2336 = vunpack.c.l.b16 %v2222
    %v2337 = vunpack.c.l.b16 %v2223
    %v2338 = vunpack.c.l.b16 %v2224
    %v2339 = vunpack.c.l.b16 %v2225
    %v2340 = vunpack.c.l.b16 %v2226
    %v2341 = vunpack.c.l.b16 %v2227
    %v2342 = vunpack.c.l.b16 %v2228
    %v2343 = vunpack.c.l.b16 %v2229
    %v2344 = vunpack.c.l.b16 %v2230
    %v2345 = vunpack.c.l.b16 %v2231
    %v2346 = vunpack.c.l.b16 %v2232
    %v2347 = vunpack.c.l.b16 %v2233
    %v2348 = vunpack.c.l.b16 %v2234
    %v2349 = vunpack.c.l.b16 %v2235
    %v2350 = vpack.c.b16 %v2319, %v2318
    %v2351 = vpack.c.b16 %v2321, %v2320
    %v2352 = vpack.c.b16 %v2323, %v2322
    %v2353 = vpack.c.b16 %v2325, %v2324
    %v2354 = vpack.c.b16 %v2327, %v2326
    %v2355 = vpack.c.b16 %v2329, %v2328
    %v2356 = vpack.c.b16 %v2331, %v2330
    %v2357 = vpack.c.b16 %v2333, %v2332
    %v2358 = vpack.c.b16 %v2335, %v2334
    %v2359 = vpack.c.b16 %v2337, %v2336
    %v2360 = vpack.c.b16 %v2339, %v2338
    %v2361 = vpack.c.b16 %v2341, %v2340
    %v2362 = vpack.c.b16 %v2343, %v2342
    %v2363 = vpack.c.b16 %v2345, %v2344
    %v2364 = vpack.c.b16 %v2347, %v2346
    %v2365 = vpack.c.b16 %v2349, %v2348
    %2382 = vmatprep.subr.bf16.mxu0 0
    %2383 = vmatpush1.bf16.msra.mxu0 %v2350
    %2384 = vmatprep.subr.bf16.mxu0 0
    %2385 = vmatpush1.bf16.msra.mxu0 %v2351
    %2386 = vmatprep.subr.bf16.mxu0 0
    %2387 = vmatpush1.bf16.msra.mxu0 %v2352
    %2388 = vmatprep.subr.bf16.mxu0 0
    %2389 = vmatpush1.bf16.msra.mxu0 %v2353
    %2390 = vmatprep.subr.bf16.mxu0 0
    %2391 = vmatpush1.bf16.msra.mxu0 %v2354
    %2392 = vmatprep.subr.bf16.mxu0 0
    %2393 = vmatpush1.bf16.msra.mxu0 %v2355
    %2394 = vmatprep.subr.bf16.mxu0 0
    %2395 = vmatpush1.bf16.msra.mxu0 %v2356
    %2396 = vmatprep.subr.bf16.mxu0 0
    %2397 = vmatpush1.bf16.msra.mxu0 %v2357
    %2398 = vmatprep.subr.bf16.mxu0 0
    %2399 = vmatpush1.bf16.msra.mxu0 %v2358
    %2400 = vmatprep.subr.bf16.mxu0 0
    %2401 = vmatpush1.bf16.msra.mxu0 %v2359
    %2402 = vmatprep.subr.bf16.mxu0 0
    %2403 = vmatpush1.bf16.msra.mxu0 %v2360
    %2404 = vmatprep.subr.bf16.mxu0 0
    %2405 = vmatpush1.bf16.msra.mxu0 %v2361
    %2406 = vmatprep.subr.bf16.mxu0 0
    %2407 = vmatpush1.bf16.msra.mxu0 %v2362
    %2408 = vmatprep.subr.bf16.mxu0 0
    %2409 = vmatpush1.bf16.msra.mxu0 %v2363
    %2410 = vmatprep.subr.bf16.mxu0 0
    %2411 = vmatpush1.bf16.msra.mxu0 %v2364
    %2412 = vmatprep.subr.bf16.mxu0 0
    %2413 = vmatpush1.bf16.msra.mxu0 %v2365
    %2414 = vmatprep.mubr.bf16.mxu0 %v2283
    %2415 = vmatmul.mubr.bf16.gmra.mrb[0].mxu0 %v2282
    %v2416 = vpop.f32.mrb[0].mxu0
    %v2417 = vadd.f32 %v2241, %v2416
    %v2418 = vpop.f32.mrb[0].mxu0
    %v2419 = vpop.f32.mrb[0].mxu0
    %v2420 = vpop.f32.mrb[0].mxu0
    %2421 = vdwg.mxu0
    %vm2422 = vcmp.gt.f32.partialorder %v2417, 0.0
    %v2423 = vmin.f32 %v2417, 0.0
    %v2424 = vmul.f32 %v2423, 1.442695
    %v2425 = vpow.pop %v2424
    %v2426 = vsub.f32 %v2425, 1.0
    %v2427 = vsel %vm2422, %v2417, %v2426
    %v2428 = vld [vmem:[#allocation20] sm:$0xff]
    %v2429 = vld [vmem:[#allocation20 + $0x8] sm:$0xff]
    %v2430 = vld [vmem:[#allocation20 + $0x10] sm:$0xff]
    %v2431 = vld [vmem:[#allocation20 + $0x18] sm:$0xff]
    %v2432 = vld [vmem:[#allocation20 + $0x20] sm:$0xff]
    %v2433 = vld [vmem:[#allocation20 + $0x28] sm:$0xff]
    %v2434 = vld [vmem:[#allocation20 + $0x30] sm:$0xff]
    %v2435 = vld [vmem:[#allocation20 + $0x38] sm:$0xff]
    %v2436 = vld [vmem:[#allocation22] sm:$0x1]
    %v2438 = vlaneseq
    %v2439 = vshrl.u32 %v2438, 7
    %v2440 = vsub.s32 0, %v2439
    %v2441 = vrot.slane %v2436, %v2440
    %v2444 = vsel %vm1282, %v2427, 0
    %2446 = vmatprep.subr.mxu0 0.0
    %2447 = vmatpush1.msra.mxu0 %v2428
    %2448 = vmatprep.subr.mxu0 0.0
    %2449 = vmatpush1.msra.mxu0 %v2429
    %2450 = vmatprep.subr.mxu0 0.0
    %2451 = vmatpush1.msra.mxu0 %v2430
    %2452 = vmatprep.subr.mxu0 0.0
    %2453 = vmatpush1.msra.mxu0 %v2431
    %2454 = vmatprep.subr.mxu0 0.0
    %2455 = vmatpush1.msra.mxu0 %v2432
    %2456 = vmatprep.subr.mxu0 0.0
    %2457 = vmatpush1.msra.mxu0 %v2433
    %2458 = vmatprep.subr.mxu0 0.0
    %2459 = vmatpush1.msra.mxu0 %v2434
    %2460 = vmatprep.subr.mxu0 0.0
    %2461 = vmatpush1.msra.mxu0 %v2435
    %2462 = vmatprep.subr.mxu0 0.0
    %2463 = vmatpush1.msra.mxu0 0.0
    %2464 = vmatprep.subr.mxu0 0.0
    %2465 = vmatpush1.msra.mxu0 0.0
    %2466 = vmatprep.subr.mxu0 0.0
    %2467 = vmatpush1.msra.mxu0 0.0
    %2468 = vmatprep.subr.mxu0 0.0
    %2469 = vmatpush1.msra.mxu0 0.0
    %2470 = vmatprep.subr.mxu0 0.0
    %2471 = vmatpush1.msra.mxu0 0.0
    %2472 = vmatprep.subr.mxu0 0.0
    %2473 = vmatpush1.msra.mxu0 0.0
    %2474 = vmatprep.subr.mxu0 0.0
    %2475 = vmatpush1.msra.mxu0 0.0
    %2476 = vmatprep.subr.mxu0 0.0
    %2477 = vmatpush1.msra.mxu0 0.0
    %2478 = vmatprep.subr.mxu0 0.0
    %2479 = vmatpush1.msra.mxu0 0.0
    %2480 = vmatprep.subr.mxu0 0.0
    %2481 = vmatpush1.msra.mxu0 0.0
    %2482 = vmatprep.subr.mxu0 0.0
    %2483 = vmatpush1.msra.mxu0 0.0
    %2484 = vmatprep.subr.mxu0 0.0
    %2485 = vmatpush1.msra.mxu0 0.0
    %2486 = vmatprep.subr.mxu0 0.0
    %2487 = vmatpush1.msra.mxu0 0.0
    %2488 = vmatprep.subr.mxu0 0.0
    %2489 = vmatpush1.msra.mxu0 0.0
    %2490 = vmatprep.subr.mxu0 0.0
    %2491 = vmatpush1.msra.mxu0 0.0
    %2492 = vmatprep.subr.mxu0 0.0
    %2493 = vmatpush1.msra.mxu0 0.0
    %2494 = vmatprep.subr.mxu0 0.0
    %2495 = vmatpush1.msra.mxu0 0.0
    %2496 = vmatprep.subr.mxu0 0.0
    %2497 = vmatpush1.msra.mxu0 0.0
    %2498 = vmatprep.subr.mxu0 0.0
    %2499 = vmatpush1.msra.mxu0 0.0
    %2500 = vmatprep.subr.mxu0 0.0
    %2501 = vmatpush1.msra.mxu0 0.0
    %2502 = vmatprep.subr.mxu0 0.0
    %2503 = vmatpush1.msra.mxu0 0.0
    %2504 = vmatprep.subr.mxu0 0.0
    %2505 = vmatpush1.msra.mxu0 0.0
    %2506 = vmatprep.subr.mxu0 0.0
    %2507 = vmatpush1.msra.mxu0 0.0
    %2508 = vmatprep.subr.mxu0 0.0
    %2509 = vmatpush1.msra.mxu0 0.0
    %2510 = vmatprep.mubr.f32.mxu0 0.0
    %2511 = vmatmul.mubr.f32.gmra.mrb[0].mxu0 %v2444
    %v2512 = vpop.f32.mrb[0].mxu0
    %v2513 = vadd.f32 %v2441, %v2512
    %v2514 = vpop.f32.mrb[0].mxu0
    %2515 = vdwg.mxu0
    %v2516 = vsub.f32 0.0, %v2513
    %v2517 = vmul.f32 %v2516, 1.442695
    %v2518 = vpow.pop %v2517
    %v2519 = vadd.f32 %v2518, 1.0
    %v2520 = vrcp.pop %v2519
    %v2521 = vmul.f32 1.0, %v2520
    %v2522 = vld [vmem:[#allocation7] sm:$0x3f]
    %v2523 = vmul.f32 %v2521, %v2522
    %vm2524 = vcmask 29696
    %v2525 = vsel %vm2524, %v2523, 0.0
    %2526 = vadd.xlane.f32.xlu0 %v2525
    %v2527 = vpop.xlane.xlu0 %2526
    %v2528 = vld [vmem:[#allocation8] sm:$0x3f]
    %v2529 = vmul.f32 %v2528, -0.2
    %v2530 = vmul.f32 %v2529, 1.442695
    %v2531 = vpow.pop %v2530
    %v2532 = vld [vmem:[#allocation10] sm:$0x3f]
    %v2533 = vmul.f32 %v2531, %v2532
    %vm2534 = vcmask 1045504
    %v2535 = vsel %vm2534, %v2533, 0.0
    %2536 = vadd.xlane.f32.xlu0 %v2535
    %v2537 = vpop.xlane.xlu0 %2536
    %v2538 = vld [vmem:[#allocation5] sm:$0x3f]
    %v2539 = vsub.f32 %v2538, %v2527
    %v2540 = vsub.f32 %v2539, %v2537
    %vm2541 = vcmask 5120
    %2542 = vst.msk [vmem:[#allocation23] sm:$0x3f] %vm2541, %v2540
    // Predicated region
    $region106: #{score_decoder_forward.1} parent=1 // pred_check
      _
    $region107: #{score_decoder_forward.1} parent=1 // pred_check_branch
      %2544 = sbr.rel (0) target = $region109
    $region108: #{score_decoder_forward.1} parent=1 // pred_region
      %s2546 = ssub.s32 128, 128
      %2547 = vsyncadd [#allocation4], %s2546
      %s2549 = sshll.u32 [#allocation23], 4
      %s2550 = int_to_ptr.vmem [resolvable:$true] %s2549
      %2552 = dma.vmem_to_hbm [thread:$0]  %s2550, 128, %s13, [#allocation4]
    $region109: #{score_decoder_forward.1} parent=1 // pred_fallthru
      _
    // Predicated region
    $region110: #{score_decoder_forward.1} parent=1 // pred_check
      _
    $region111: #{score_decoder_forward.1} parent=1 // pred_check_branch
      %2554 = sbr.rel (0) target = $region113
    $region112: #{score_decoder_forward.1} parent=1 // pred_region
      %2555 = dma.done [#allocation4], 128
    $region113: #{score_decoder_forward.1} parent=1 // pred_fallthru
      _
    %2556 = vsyncpa [#allocation3], 1
    %2557 = vsyncpa [#allocation6], 1
    %2558 = vsyncpa [#allocation9], 1
    %2559 = vsyncpa [#allocation12], 1
    %2560 = vsyncpa [#allocation15], 1
    %2561 = vsyncpa [#allocation18], 1
    %2562 = vsyncpa [#allocation21], 1
    %2563 = vsyncpa [#allocation4], 1

</llo_original>
